<compile_context>
chip_gen: v5e
topology: v5e:2x2
jax: 0.10.0
libtpu: 0.0.40
codegen_flags: <defaults>
</compile_context>

<pallas_src>
import functools

import jax
import jax.numpy as jnp
from jax import lax
from jax.experimental import pallas as pl
from jax.experimental.pallas import tpu as pltpu

SRT_WT = 5.0
ORT_WT = 5.0
SOT_WT = 5.0
TIME_REG_WT = 1.0
EMB_REG_WT = 0.005

_MIB = 1024 * 1024


def _round_up(x, m):
    return ((x + m - 1) // m) * m


def _vmem_budget_bytes():
    """Per-pallas_call VMEM limit; conservative fallback is safe on every gen."""
    try:
        cap = getattr(pltpu.get_tpu_info(), "vmem_capacity_bytes", None)
        if cap:
            return int(min(cap // 2, 64 * _MIB))
    except Exception:
        pass
    return 32 * _MIB  # v7x scoped default; fits v5e/v6e trivially


# ----------------------------------------------------------------------------
# Combine + regularizer kernel (batch-tiled; runs once per forward).
# Outputs: u1 (B,D), u2 (B,D) in matmul dtype, bias (B,1) f32, reg (1,1) SMEM.
# ----------------------------------------------------------------------------
def _combine_kernel(s_re, s_im, o_re, o_im, r_re, r_im, rs_re, rs_im,
                    ro_re, ro_im, t_re, t_im, to_re, to_im,
                    Ts_re, Ts_im, To_re, To_im,
                    u1_ref, u2_ref, bias_ref, reg_ref,
                    *, subject_query, batch_size, tile_b):
    i = pl.program_id(0)
    sre, sim = s_re[...], s_im[...]
    ore, oim = o_re[...], o_im[...]
    rre, rim = r_re[...], r_im[...]
    rsre, rsim = rs_re[...], rs_im[...]
    rore, roim = ro_re[...], ro_im[...]
    tre, tim = t_re[...], t_im[...]
    tore, toim = to_re[...], to_im[...]

    if subject_query:                       # type_ == 's'
        a1 = sim * rre + sre * rim          # sro (full softmax over entities)
        a2 = sre * rre - sim * rim
        b1 = tim * rore + tre * roim        # ort (full softmax over entities)
        b2 = tre * rore - tim * roim
        c1 = sim * tre + sre * tim          # sot (full softmax over entities)
        c2 = sre * tre - sim * tim
        u1 = a1 + ORT_WT * b1 + SOT_WT * c1
        u2 = a2 + ORT_WT * b2 + SOT_WT * c2
        p1 = tim * rsre - tre * rsim        # srt (reduced per-row scalar)
        p2 = tim * rsim + tre * rsre
        bias = SRT_WT * jnp.sum(p1 * sim + p2 * sre, axis=-1, keepdims=True)
    else:                                   # type_ == 'o'
        a1 = oim * rre - ore * rim          # sro (subject side)
        a2 = oim * rim + ore * rre
        b1 = tim * rsre - tre * rsim        # srt
        b2 = tim * rsim + tre * rsre
        c1 = oim * tre - ore * tim          # sot
        c2 = oim * tim + ore * tre
        u1 = a1 + SRT_WT * b1 + SOT_WT * c1
        u2 = a2 + SRT_WT * b2 + SOT_WT * c2
        p1 = oim * rore - ore * roim        # ort (reduced per-row scalar)
        p2 = oim * roim + ore * rore
        bias = ORT_WT * jnp.sum(p1 * tim + p2 * tre, axis=-1, keepdims=True)

    u1_ref[...] = u1.astype(u1_ref.dtype)
    u2_ref[...] = u2.astype(u2_ref.dtype)
    bias_ref[...] = bias

    # ---- regularizer (reg == 3) fused here to reuse the gathered embeddings.
    needs_mask = (batch_size % tile_b) != 0
    if needs_mask:
        row = i * tile_b + lax.broadcasted_iota(jnp.int32, (tile_b, 1), 0)
        mask = row < batch_size

        def l3(a, b):
            q = a * a + b * b
            return jnp.sum(jnp.where(mask, q * jnp.sqrt(q), 0.0))
    else:
        def l3(a, b):
            q = a * a + b * b
            return jnp.sum(q * jnp.sqrt(q))

    emb = (l3(sre, sim) + l3(ore, oim) + l3(rre, rim) + l3(rsre, rsim)
           + l3(rore, roim) + l3(tre, tim) + l3(tore, toim))
    emb = EMB_REG_WT * (emb / batch_size)

    @pl.when(i == 0)
    def _():
        def tr(re_ref, im_ref):
            re = re_ref[...]
            im = im_ref[...]
            dre = re[1:] - re[:-1]
            dim_ = im[1:] - im[:-1]
            q = dre * dre + dim_ * dim_ + 1e-9
            return jnp.sum(q * jnp.sqrt(q)) / (re.shape[0] - 1)

        reg_ref[0, 0] = TIME_REG_WT * (tr(Ts_re, Ts_im) + tr(To_re, To_im))

    reg_ref[0, 0] = reg_ref[0, 0] + emb


def _choose_combine_tile_b(B, D, T2, budget):
    # Double-buffered per-batch-row bytes: 14 gathered inputs + u1 + u2 + bias.
    per_row = 2 * (14 * D * 4 + 2 * D * 4 + 8)
    tables = 2 * 4 * T2 * D * 4          # resident time tables (conservative)
    avail = max(budget - tables, per_row * 8)
    tb = (avail // per_row // 8) * 8
    tb = max(8, min(512, tb))
    return B if tb >= B else tb


def _combine_pallas(type_, gathered, tables, u_dtype, vmem_limit):
    B, D = gathered[0].shape
    T2 = tables[0].shape[0]
    TB = _choose_combine_tile_b(B, D, T2, int(0.8 * vmem_limit))
    n_b = pl.cdiv(B, TB)
    kernel = functools.partial(_combine_kernel, subject_query=(type_ == 's'),
                               batch_size=B, tile_b=TB)
    g_spec = pl.BlockSpec((TB, D), lambda i: (i, 0))
    tbl_spec = pl.BlockSpec((T2, D), lambda i: (0, 0))
    u1, u2, bias, reg = pl.pallas_call(
        kernel,
        out_shape=(jax.ShapeDtypeStruct((B, D), u_dtype),
                   jax.ShapeDtypeStruct((B, D), u_dtype),
                   jax.ShapeDtypeStruct((B, 1), jnp.float32),
                   jax.ShapeDtypeStruct((1, 1), jnp.float32)),
        grid=(n_b,),
        in_specs=[g_spec] * 14 + [tbl_spec] * 4,
        out_specs=(pl.BlockSpec((TB, D), lambda i: (i, 0)),
                   pl.BlockSpec((TB, D), lambda i: (i, 0)),
                   pl.BlockSpec((TB, 1), lambda i: (i, 0)),
                   pl.BlockSpec((1, 1), lambda i: (0, 0),
                                memory_space=pltpu.MemorySpace.SMEM)),
        compiler_params=pltpu.CompilerParams(
            dimension_semantics=("arbitrary",),
            vmem_limit_bytes=vmem_limit),
    )(*gathered, *tables)
    return u1, u2, bias, reg[0, 0]


# ----------------------------------------------------------------------------
# Score kernel: out[b, n] = u1[b,:] . Eim_T[:, n] + u2[b,:] . Ere_T[:, n] + bias[b]
# with pre-transposed (D, N) entity tables streamed once, f32 accumulation.
# ----------------------------------------------------------------------------
_DN_KN = (((1,), (0,)), ((), ()))  # (TB, D) @ (D, TN)


def _score_kernel(u1_ref, u2_ref, bias_ref, eim_ref, ere_ref, out_ref):
    acc = lax.dot_general(u1_ref[...], eim_ref[...], _DN_KN,
                          preferred_element_type=jnp.float32)
    acc = acc + lax.dot_general(u2_ref[...], ere_ref[...], _DN_KN,
                                preferred_element_type=jnp.float32)
    out_ref[...] = acc + bias_ref[...]


def _choose_score_tiles(B, D, N, e_bytes, u_bytes, budget):
    """VMEM/dtype-aware tiles: account for K=D streams, out tile and double
    buffering; keep >=2 lane-dense entity tiles for megacore when possible."""
    TB = B if B <= 256 else 256
    n_pad = _round_up(N, 128)
    fixed = 2 * (2 * TB * D * u_bytes + TB * 4)          # u1/u2/bias buffers
    per_tn = 2 * (2 * D * e_bytes + TB * 4)              # e tiles + out tile
    avail = max(budget - fixed, per_tn * 128)
    tn = (avail // per_tn // 128) * 128
    tn = max(128, min(1024, tn, n_pad))
    if n_pad >= 256:                                     # >= 2 entity tiles
        tn = min(tn, max(128, ((n_pad // 2) // 128) * 128))
    return TB, tn


def _score_pallas(u1, u2, bias, e_im_t, e_re_t, vmem_limit):
    B, D = u1.shape
    N = e_im_t.shape[1]
    TB, TN = _choose_score_tiles(B, D, N, e_im_t.dtype.itemsize,
                                 u1.dtype.itemsize, int(0.8 * vmem_limit))
    # Entity axis outermost: the big (D, N) tables are streamed exactly once;
    # only the small u tiles are re-fetched per entity tile.
    grid = (pl.cdiv(N, TN), pl.cdiv(B, TB))
    return pl.pallas_call(
        _score_kernel,
        out_shape=jax.ShapeDtypeStruct((B, N), jnp.float32),
        grid=grid,
        in_specs=[pl.BlockSpec((TB, D), lambda j, i: (i, 0)),
                  pl.BlockSpec((TB, D), lambda j, i: (i, 0)),
                  pl.BlockSpec((TB, 1), lambda j, i: (i, 0)),
                  pl.BlockSpec((D, TN), lambda j, i: (0, j)),
                  pl.BlockSpec((D, TN), lambda j, i: (0, j))],
        out_specs=pl.BlockSpec((TB, TN), lambda j, i: (i, j)),
        compiler_params=pltpu.CompilerParams(
            dimension_semantics=("parallel", "parallel"),
            vmem_limit_bytes=vmem_limit),
    )(u1, u2, bias, e_im_t, e_re_t)


# ----------------------------------------------------------------------------
# Module wrapper (deterministic synthetic init; E2 embeddings omitted since the
# default reg==3 path never reads them).
# ----------------------------------------------------------------------------
class TimeplexBase:
    def __init__(self, sizes, rank, key, init_std=0.05,
                 matmul_dtype=jnp.bfloat16):
        n_ent, n_rel, _, n_time = sizes
        self.sizes = sizes
        self.entity_count = n_ent
        self.embedding_dim = rank
        # bf16 tables halve HBM traffic on the memory-bound score matmul; the
        # f32 MXU accumulate keeps numerics close. Pass jnp.float32 for exact.
        self.matmul_dtype = matmul_dtype
        self.vmem_limit = _vmem_budget_bytes()
        keys = jax.random.split(key, 12)

        def emb(k, n):
            return (init_std * jax.random.normal(k, (n, rank))).astype(jnp.float32)

        self.params = {
            'E_re': emb(keys[0], n_ent), 'E_im': emb(keys[1], n_ent),
            'R_re': emb(keys[2], 2 * n_rel), 'R_im': emb(keys[3], 2 * n_rel),
            'Rs_re': emb(keys[4], 2 * n_rel), 'Rs_im': emb(keys[5], 2 * n_rel),
            'Ro_re': emb(keys[6], 2 * n_rel), 'Ro_im': emb(keys[7], 2 * n_rel),
            'Ts_re': emb(keys[8], n_time + 2), 'Ts_im': emb(keys[9], n_time + 2),
            'To_re': emb(keys[10], n_time + 2), 'To_im': emb(keys[11], n_time + 2),
        }
        # Pre-transposed lane-dense entity tables (D, N), built once
        # (forward-only module), narrowed to the matmul dtype.
        self.e_im_t = self.params['E_im'].T.astype(self.matmul_dtype)
        self.e_re_t = self.params['E_re'].T.astype(self.matmul_dtype)

    def forward(self, x, weight=None, type_='s'):
        # `weight` is unused in the reference PyTorch forward; kept for parity.
        if type_ not in ('s', 'o'):
            raise ValueError(type_)
        p = self.params
        s, r, o, t = x[:, 0], x[:, 1], x[:, 2], x[:, 3]
        gathered = (p['E_re'][s], p['E_im'][s], p['E_re'][o], p['E_im'][o],
                    p['R_re'][r], p['R_im'][r], p['Rs_re'][r], p['Rs_im'][r],
                    p['Ro_re'][r], p['Ro_im'][r], p['Ts_re'][t], p['Ts_im'][t],
                    p['To_re'][t], p['To_im'][t])
        tables = (p['Ts_re'], p['Ts_im'], p['To_re'], p['To_im'])
        u1, u2, bias, reg = _combine_pallas(type_, gathered, tables,
                                            self.matmul_dtype, self.vmem_limit)
        result = _score_pallas(u1, u2, bias, self.e_im_t, self.e_re_t,
                               self.vmem_limit)
        return result.reshape(-1, self.entity_count), reg


# ----------------------------------------------------------------------------
# Pure-JAX reference (direct transcription of the PyTorch forward) for checking.
# ----------------------------------------------------------------------------
def _reg_ref(p, x):
    s, r, o, t = x[:, 0], x[:, 1], x[:, 2], x[:, 3]
    B = s.shape[0]

    def l3(a, b):
        return jnp.sum(jnp.sqrt(a ** 2 + b ** 2) ** 3)

    reg = (l3(p['E_re'][s], p['E_im'][s]) + l3(p['E_re'][o], p['E_im'][o])
           + l3(p['R_re'][r], p['R_im'][r]) + l3(p['Rs_re'][r], p['Rs_im'][r])
           + l3(p['Ro_re'][r], p['Ro_im'][r]) + l3(p['Ts_re'][t], p['Ts_im'][t])
           + l3(p['To_re'][t], p['To_im'][t]))
    ret = EMB_REG_WT * (reg / B)

    def tr(re, im):
        dre = re[1:] - re[:-1]
        dim = im[1:] - im[:-1]
        return jnp.sum(jnp.sqrt(dre ** 2 + dim ** 2 + 1e-9) ** 3) / (re.shape[0] - 1)

    time_reg = tr(p['Ts_re'], p['Ts_im']) + tr(p['To_re'], p['To_im'])
    return ret + TIME_REG_WT * time_reg


def _forward_ref(p, x, type_):
    E_re, E_im = p['E_re'], p['E_im']
    N, D = E_re.shape
    r, t = x[:, 1], x[:, 3]
    r_re, r_im = p['R_re'][r][:, None, :], p['R_im'][r][:, None, :]
    rs_re, rs_im = p['Rs_re'][r][:, None, :], p['Rs_im'][r][:, None, :]
    ro_re, ro_im = p['Ro_re'][r][:, None, :], p['Ro_im'][r][:, None, :]
    t_re, t_im = p['Ts_re'][t][:, None, :], p['Ts_im'][t][:, None, :]
    if type_ == 's':
        s = x[:, 0]
        s_re, s_im = E_re[s][:, None, :], E_im[s][:, None, :]
        sro = ((s_im * r_re + s_re * r_im).reshape(-1, D) @ E_im.T
               + (s_re * r_re - s_im * r_im).reshape(-1, D) @ E_re.T)
        srt = jnp.sum((t_im * rs_re - t_re * rs_im) * s_im
                      + (t_im * rs_im + t_re * rs_re) * s_re, axis=-1)
        ort = ((t_im * ro_re + t_re * ro_im).reshape(-1, D) @ E_im.T
               + (t_re * ro_re - t_im * ro_im).reshape(-1, D) @ E_re.T)
        sot = ((s_im * t_re + s_re * t_im).reshape(-1, D) @ E_im.T
               + (s_re * t_re - s_im * t_im).reshape(-1, D) @ E_re.T)
    else:
        o = x[:, 2]
        o_re, o_im = E_re[o][:, None, :], E_im[o][:, None, :]
        sro = ((o_im * r_re - o_re * r_im).reshape(-1, D) @ E_im.T
               + (o_im * r_im + o_re * r_re).reshape(-1, D) @ E_re.T)
        srt = ((t_im * rs_re - t_re * rs_im).reshape(-1, D) @ E_im.T
               + (t_im * rs_im + t_re * rs_re).reshape(-1, D) @ E_re.T)
        ort = jnp.sum((o_im * ro_re - o_re * ro_im) * t_im
                      + (o_im * ro_im + o_re * ro_re) * t_re, axis=-1)
        sot = ((o_im * t_re - o_re * t_im).reshape(-1, D) @ E_im.T
               + (o_im * t_im + o_re * t_re).reshape(-1, D) @ E_re.T)
    result = sro + SRT_WT * srt + ORT_WT * ort + SOT_WT * sot
    return result.reshape(-1, N), _reg_ref(p, x)


if __name__ == "__main__":
    key = jax.random.PRNGKey(0)
    sizes = (256, 6, 256, 16)   # (n_entities, n_relations, _, n_time_intervals)
    rank = 64
    B = 8

    model_bf16 = TimeplexBase(sizes, rank, key)                        # default: bf16 tables
    model_f32 = TimeplexBase(sizes, rank, key, matmul_dtype=jnp.float32)

    kx = jax.random.split(jax.random.PRNGKey(0), 4)
    s_idx = jax.random.randint(kx[0], (B,), 0, sizes[0])
    r_idx = jax.random.randint(kx[1], (B,), 0, 2 * sizes[1])
    o_idx = jax.random.randint(kx[2], (B,), 0, sizes[0])
    t_idx = jax.random.randint(kx[3], (B,), 0, sizes[3] + 2)
    x = jnp.stack([s_idx, r_idx, o_idx, t_idx], axis=1).astype(jnp.int32)

    for type_ in ('s', 'o'):
        ref_scores, ref_reg = _forward_ref(model_f32.params, x, type_)

        scores, reg = model_f32.forward(x, None, type_)
        jax.block_until_ready((scores, reg))
        assert scores.shape == (B, sizes[0])
        assert jnp.allclose(scores, ref_scores, rtol=1e-4, atol=1e-3), ('f32', type_)
        assert jnp.allclose(reg, ref_reg, rtol=1e-4, atol=1e-4), ('f32 reg', type_)

        scores_bf, reg_bf = model_bf16.forward(x, None, type_)
        jax.block_until_ready((scores_bf, reg_bf))
        assert scores_bf.shape == (B, sizes[0])
        assert jnp.allclose(scores_bf, ref_scores, rtol=5e-2, atol=5e-3), ('bf16', type_)
        assert jnp.allclose(reg_bf, ref_reg, rtol=1e-4, atol=1e-4), ('bf16 reg', type_)

    print("KERNEL_OK")
</pallas_src>

<mosaic_0001>
module attributes {stable_mosaic.version = 11 : i64} {
  func.func @_combine_kernel(%arg0: i32, %arg1: memref<8x64xf32, #tpu.memory_space<vmem>>, %arg2: memref<8x64xf32, #tpu.memory_space<vmem>>, %arg3: memref<8x64xf32, #tpu.memory_space<vmem>>, %arg4: memref<8x64xf32, #tpu.memory_space<vmem>>, %arg5: memref<8x64xf32, #tpu.memory_space<vmem>>, %arg6: memref<8x64xf32, #tpu.memory_space<vmem>>, %arg7: memref<8x64xf32, #tpu.memory_space<vmem>>, %arg8: memref<8x64xf32, #tpu.memory_space<vmem>>, %arg9: memref<8x64xf32, #tpu.memory_space<vmem>>, %arg10: memref<8x64xf32, #tpu.memory_space<vmem>>, %arg11: memref<8x64xf32, #tpu.memory_space<vmem>>, %arg12: memref<8x64xf32, #tpu.memory_space<vmem>>, %arg13: memref<8x64xf32, #tpu.memory_space<vmem>>, %arg14: memref<8x64xf32, #tpu.memory_space<vmem>>, %arg15: memref<18x64xf32, #tpu.memory_space<vmem>>, %arg16: memref<18x64xf32, #tpu.memory_space<vmem>>, %arg17: memref<18x64xf32, #tpu.memory_space<vmem>>, %arg18: memref<18x64xf32, #tpu.memory_space<vmem>>, %arg19: memref<8x64xf32, #tpu.memory_space<vmem>>, %arg20: memref<8x64xf32, #tpu.memory_space<vmem>>, %arg21: memref<8x1xf32, #tpu.memory_space<vmem>>, %arg22: memref<1x1xf32, #tpu.memory_space<smem>>) attributes {dimension_semantics = [#tpu.dimension_semantics<arbitrary>], iteration_bounds = array<i64: 1>, scalar_prefetch = 0 : i64, scratch_operands = 0 : i64, tpu.core_type = #tpu.core_type<tc>, window_params = [{transform_indices = @transform_0, window_bounds = array<i64: 8, 64>}, {transform_indices = @transform_1, window_bounds = array<i64: 8, 64>}, {transform_indices = @transform_2, window_bounds = array<i64: 8, 64>}, {transform_indices = @transform_3, window_bounds = array<i64: 8, 64>}, {transform_indices = @transform_4, window_bounds = array<i64: 8, 64>}, {transform_indices = @transform_5, window_bounds = array<i64: 8, 64>}, {transform_indices = @transform_6, window_bounds = array<i64: 8, 64>}, {transform_indices = @transform_7, window_bounds = array<i64: 8, 64>}, {transform_indices = @transform_8, window_bounds = array<i64: 8, 64>}, {transform_indices = @transform_9, window_bounds = array<i64: 8, 64>}, {transform_indices = @transform_10, window_bounds = array<i64: 8, 64>}, {transform_indices = @transform_11, window_bounds = array<i64: 8, 64>}, {transform_indices = @transform_12, window_bounds = array<i64: 8, 64>}, {transform_indices = @transform_13, window_bounds = array<i64: 8, 64>}, {pipeline_mode = #tpu.pipeline_mode<synchronous>, transform_indices = @transform_14, window_bounds = array<i64: 18, 64>}, {pipeline_mode = #tpu.pipeline_mode<synchronous>, transform_indices = @transform_15, window_bounds = array<i64: 18, 64>}, {pipeline_mode = #tpu.pipeline_mode<synchronous>, transform_indices = @transform_16, window_bounds = array<i64: 18, 64>}, {pipeline_mode = #tpu.pipeline_mode<synchronous>, transform_indices = @transform_17, window_bounds = array<i64: 18, 64>}, {transform_indices = @transform_18, window_bounds = array<i64: 8, 64>}, {transform_indices = @transform_19, window_bounds = array<i64: 8, 64>}, {transform_indices = @transform_20, window_bounds = array<i64: 8, 1>}, {transform_indices = @transform_21, window_bounds = array<i64: 1, 1>}]} {
    %c0 = arith.constant 0 : index
    %c0_0 = arith.constant 0 : index
    %0 = vector.load %arg1[%c0, %c0_0] : memref<8x64xf32, #tpu.memory_space<vmem>>, vector<8x64xf32>
    %c0_1 = arith.constant 0 : index
    %c0_2 = arith.constant 0 : index
    %1 = vector.load %arg2[%c0_1, %c0_2] : memref<8x64xf32, #tpu.memory_space<vmem>>, vector<8x64xf32>
    %c0_3 = arith.constant 0 : index
    %c0_4 = arith.constant 0 : index
    %2 = vector.load %arg3[%c0_3, %c0_4] : memref<8x64xf32, #tpu.memory_space<vmem>>, vector<8x64xf32>
    %c0_5 = arith.constant 0 : index
    %c0_6 = arith.constant 0 : index
    %3 = vector.load %arg4[%c0_5, %c0_6] : memref<8x64xf32, #tpu.memory_space<vmem>>, vector<8x64xf32>
    %c0_7 = arith.constant 0 : index
    %c0_8 = arith.constant 0 : index
    %4 = vector.load %arg5[%c0_7, %c0_8] : memref<8x64xf32, #tpu.memory_space<vmem>>, vector<8x64xf32>
    %c0_9 = arith.constant 0 : index
    %c0_10 = arith.constant 0 : index
    %5 = vector.load %arg6[%c0_9, %c0_10] : memref<8x64xf32, #tpu.memory_space<vmem>>, vector<8x64xf32>
    %c0_11 = arith.constant 0 : index
    %c0_12 = arith.constant 0 : index
    %6 = vector.load %arg7[%c0_11, %c0_12] : memref<8x64xf32, #tpu.memory_space<vmem>>, vector<8x64xf32>
    %c0_13 = arith.constant 0 : index
    %c0_14 = arith.constant 0 : index
    %7 = vector.load %arg8[%c0_13, %c0_14] : memref<8x64xf32, #tpu.memory_space<vmem>>, vector<8x64xf32>
    %c0_15 = arith.constant 0 : index
    %c0_16 = arith.constant 0 : index
    %8 = vector.load %arg9[%c0_15, %c0_16] : memref<8x64xf32, #tpu.memory_space<vmem>>, vector<8x64xf32>
    %c0_17 = arith.constant 0 : index
    %c0_18 = arith.constant 0 : index
    %9 = vector.load %arg10[%c0_17, %c0_18] : memref<8x64xf32, #tpu.memory_space<vmem>>, vector<8x64xf32>
    %c0_19 = arith.constant 0 : index
    %c0_20 = arith.constant 0 : index
    %10 = vector.load %arg11[%c0_19, %c0_20] : memref<8x64xf32, #tpu.memory_space<vmem>>, vector<8x64xf32>
    %c0_21 = arith.constant 0 : index
    %c0_22 = arith.constant 0 : index
    %11 = vector.load %arg12[%c0_21, %c0_22] : memref<8x64xf32, #tpu.memory_space<vmem>>, vector<8x64xf32>
    %c0_23 = arith.constant 0 : index
    %c0_24 = arith.constant 0 : index
    %12 = vector.load %arg13[%c0_23, %c0_24] : memref<8x64xf32, #tpu.memory_space<vmem>>, vector<8x64xf32>
    %c0_25 = arith.constant 0 : index
    %c0_26 = arith.constant 0 : index
    %13 = vector.load %arg14[%c0_25, %c0_26] : memref<8x64xf32, #tpu.memory_space<vmem>>, vector<8x64xf32>
    %14 = arith.mulf %1, %4 : vector<8x64xf32>
    %15 = arith.mulf %0, %5 : vector<8x64xf32>
    %16 = arith.addf %14, %15 : vector<8x64xf32>
    %17 = arith.mulf %0, %4 : vector<8x64xf32>
    %18 = arith.mulf %1, %5 : vector<8x64xf32>
    %19 = arith.subf %17, %18 : vector<8x64xf32>
    %20 = arith.mulf %11, %8 : vector<8x64xf32>
    %21 = arith.mulf %10, %9 : vector<8x64xf32>
    %22 = arith.addf %20, %21 : vector<8x64xf32>
    %23 = arith.mulf %10, %8 : vector<8x64xf32>
    %24 = arith.mulf %11, %9 : vector<8x64xf32>
    %25 = arith.subf %23, %24 : vector<8x64xf32>
    %26 = arith.mulf %1, %10 : vector<8x64xf32>
    %27 = arith.mulf %0, %11 : vector<8x64xf32>
    %28 = arith.addf %26, %27 : vector<8x64xf32>
    %29 = arith.mulf %0, %10 : vector<8x64xf32>
    %30 = arith.mulf %1, %11 : vector<8x64xf32>
    %31 = arith.subf %29, %30 : vector<8x64xf32>
    %cst = arith.constant 5.000000e+00 : f32
    %32 = vector.broadcast %cst : f32 to vector<8x64xf32>
    %33 = arith.mulf %32, %22 : vector<8x64xf32>
    %34 = arith.addf %16, %33 : vector<8x64xf32>
    %cst_27 = arith.constant 5.000000e+00 : f32
    %35 = vector.broadcast %cst_27 : f32 to vector<8x64xf32>
    %36 = arith.mulf %35, %28 : vector<8x64xf32>
    %37 = arith.addf %34, %36 : vector<8x64xf32>
    %cst_28 = arith.constant 5.000000e+00 : f32
    %38 = vector.broadcast %cst_28 : f32 to vector<8x64xf32>
    %39 = arith.mulf %38, %25 : vector<8x64xf32>
    %40 = arith.addf %19, %39 : vector<8x64xf32>
    %cst_29 = arith.constant 5.000000e+00 : f32
    %41 = vector.broadcast %cst_29 : f32 to vector<8x64xf32>
    %42 = arith.mulf %41, %31 : vector<8x64xf32>
    %43 = arith.addf %40, %42 : vector<8x64xf32>
    %44 = arith.mulf %11, %6 : vector<8x64xf32>
    %45 = arith.mulf %10, %7 : vector<8x64xf32>
    %46 = arith.subf %44, %45 : vector<8x64xf32>
    %47 = arith.mulf %11, %7 : vector<8x64xf32>
    %48 = arith.mulf %10, %6 : vector<8x64xf32>
    %49 = arith.addf %47, %48 : vector<8x64xf32>
    %50 = arith.mulf %46, %1 : vector<8x64xf32>
    %51 = arith.mulf %49, %0 : vector<8x64xf32>
    %52 = arith.addf %50, %51 : vector<8x64xf32>
    %cst_30 = arith.constant dense<0.000000e+00> : vector<8xf32>
    %53 = vector.multi_reduction <add>, %52, %cst_30 [1] : vector<8x64xf32> to vector<8xf32>
    %54 = vector.shape_cast %53 : vector<8xf32> to vector<8x1xf32>
    %cst_31 = arith.constant 5.000000e+00 : f32
    %55 = vector.broadcast %cst_31 : f32 to vector<8x1xf32>
    %56 = arith.mulf %55, %54 : vector<8x1xf32>
    %c0_32 = arith.constant 0 : index
    %c0_33 = arith.constant 0 : index
    %57 = vector.load %arg19[%c0_32, %c0_33] : memref<8x64xf32, #tpu.memory_space<vmem>>, vector<8x64xf32>
    tpu.vector_store %arg19[%c0_32, %c0_33], %37 {strides = array<i32>} : memref<8x64xf32, #tpu.memory_space<vmem>>, vector<8x64xf32>,
    %c0_34 = arith.constant 0 : index
    %c0_35 = arith.constant 0 : index
    %58 = vector.load %arg20[%c0_34, %c0_35] : memref<8x64xf32, #tpu.memory_space<vmem>>, vector<8x64xf32>
    tpu.vector_store %arg20[%c0_34, %c0_35], %43 {strides = array<i32>} : memref<8x64xf32, #tpu.memory_space<vmem>>, vector<8x64xf32>,
    %c0_36 = arith.constant 0 : index
    %c0_37 = arith.constant 0 : index
    %59 = vector.load %arg21[%c0_36, %c0_37] : memref<8x1xf32, #tpu.memory_space<vmem>>, vector<8x1xf32>
    tpu.vector_store %arg21[%c0_36, %c0_37], %56 {strides = array<i32>} : memref<8x1xf32, #tpu.memory_space<vmem>>, vector<8x1xf32>,
    %60 = arith.mulf %0, %0 : vector<8x64xf32>
    %61 = arith.mulf %1, %1 : vector<8x64xf32>
    %62 = arith.addf %60, %61 : vector<8x64xf32>
    %63 = math.sqrt %62 : vector<8x64xf32>
    %64 = arith.mulf %62, %63 : vector<8x64xf32>
    %65 = vector.shape_cast %64 : vector<8x64xf32> to vector<1x8x64xf32>
    %cst_38 = arith.constant dense<0.000000e+00> : vector<1xf32>
    %66 = vector.multi_reduction <add>, %65, %cst_38 [1, 2] : vector<1x8x64xf32> to vector<1xf32>
    %67 = vector.shape_cast %66 : vector<1xf32> to vector<1x1x1xf32>
    %68 = vector.extract %67[0, 0, 0] : f32 from vector<1x1x1xf32>
    %69 = arith.mulf %2, %2 : vector<8x64xf32>
    %70 = arith.mulf %3, %3 : vector<8x64xf32>
    %71 = arith.addf %69, %70 : vector<8x64xf32>
    %72 = math.sqrt %71 : vector<8x64xf32>
    %73 = arith.mulf %71, %72 : vector<8x64xf32>
    %74 = vector.shape_cast %73 : vector<8x64xf32> to vector<1x8x64xf32>
    %cst_39 = arith.constant dense<0.000000e+00> : vector<1xf32>
    %75 = vector.multi_reduction <add>, %74, %cst_39 [1, 2] : vector<1x8x64xf32> to vector<1xf32>
    %76 = vector.shape_cast %75 : vector<1xf32> to vector<1x1x1xf32>
    %77 = vector.extract %76[0, 0, 0] : f32 from vector<1x1x1xf32>
    %78 = arith.addf %68, %77 : f32
    %79 = arith.mulf %4, %4 : vector<8x64xf32>
    %80 = arith.mulf %5, %5 : vector<8x64xf32>
    %81 = arith.addf %79, %80 : vector<8x64xf32>
    %82 = math.sqrt %81 : vector<8x64xf32>
    %83 = arith.mulf %81, %82 : vector<8x64xf32>
    %84 = vector.shape_cast %83 : vector<8x64xf32> to vector<1x8x64xf32>
    %cst_40 = arith.constant dense<0.000000e+00> : vector<1xf32>
    %85 = vector.multi_reduction <add>, %84, %cst_40 [1, 2] : vector<1x8x64xf32> to vector<1xf32>
    %86 = vector.shape_cast %85 : vector<1xf32> to vector<1x1x1xf32>
    %87 = vector.extract %86[0, 0, 0] : f32 from vector<1x1x1xf32>
    %88 = arith.addf %78, %87 : f32
    %89 = arith.mulf %6, %6 : vector<8x64xf32>
    %90 = arith.mulf %7, %7 : vector<8x64xf32>
    %91 = arith.addf %89, %90 : vector<8x64xf32>
    %92 = math.sqrt %91 : vector<8x64xf32>
    %93 = arith.mulf %91, %92 : vector<8x64xf32>
    %94 = vector.shape_cast %93 : vector<8x64xf32> to vector<1x8x64xf32>
    %cst_41 = arith.constant dense<0.000000e+00> : vector<1xf32>
    %95 = vector.multi_reduction <add>, %94, %cst_41 [1, 2] : vector<1x8x64xf32> to vector<1xf32>
    %96 = vector.shape_cast %95 : vector<1xf32> to vector<1x1x1xf32>
    %97 = vector.extract %96[0, 0, 0] : f32 from vector<1x1x1xf32>
    %98 = arith.addf %88, %97 : f32
    %99 = arith.mulf %8, %8 : vector<8x64xf32>
    %100 = arith.mulf %9, %9 : vector<8x64xf32>
    %101 = arith.addf %99, %100 : vector<8x64xf32>
    %102 = math.sqrt %101 : vector<8x64xf32>
    %103 = arith.mulf %101, %102 : vector<8x64xf32>
    %104 = vector.shape_cast %103 : vector<8x64xf32> to vector<1x8x64xf32>
    %cst_42 = arith.constant dense<0.000000e+00> : vector<1xf32>
    %105 = vector.multi_reduction <add>, %104, %cst_42 [1, 2] : vector<1x8x64xf32> to vector<1xf32>
    %106 = vector.shape_cast %105 : vector<1xf32> to vector<1x1x1xf32>
    %107 = vector.extract %106[0, 0, 0] : f32 from vector<1x1x1xf32>
    %108 = arith.addf %98, %107 : f32
    %109 = arith.mulf %10, %10 : vector<8x64xf32>
    %110 = arith.mulf %11, %11 : vector<8x64xf32>
    %111 = arith.addf %109, %110 : vector<8x64xf32>
    %112 = math.sqrt %111 : vector<8x64xf32>
    %113 = arith.mulf %111, %112 : vector<8x64xf32>
    %114 = vector.shape_cast %113 : vector<8x64xf32> to vector<1x8x64xf32>
    %cst_43 = arith.constant dense<0.000000e+00> : vector<1xf32>
    %115 = vector.multi_reduction <add>, %114, %cst_43 [1, 2] : vector<1x8x64xf32> to vector<1xf32>
    %116 = vector.shape_cast %115 : vector<1xf32> to vector<1x1x1xf32>
    %117 = vector.extract %116[0, 0, 0] : f32 from vector<1x1x1xf32>
    %118 = arith.addf %108, %117 : f32
    %119 = arith.mulf %12, %12 : vector<8x64xf32>
    %120 = arith.mulf %13, %13 : vector<8x64xf32>
    %121 = arith.addf %119, %120 : vector<8x64xf32>
    %122 = math.sqrt %121 : vector<8x64xf32>
    %123 = arith.mulf %121, %122 : vector<8x64xf32>
    %124 = vector.shape_cast %123 : vector<8x64xf32> to vector<1x8x64xf32>
    %cst_44 = arith.constant dense<0.000000e+00> : vector<1xf32>
    %125 = vector.multi_reduction <add>, %124, %cst_44 [1, 2] : vector<1x8x64xf32> to vector<1xf32>
    %126 = vector.shape_cast %125 : vector<1xf32> to vector<1x1x1xf32>
    %127 = vector.extract %126[0, 0, 0] : f32 from vector<1x1x1xf32>
    %128 = arith.addf %118, %127 : f32
    %cst_45 = arith.constant 8.000000e+00 : f32
    %129 = arith.divf %128, %cst_45 : f32
    %cst_46 = arith.constant 5.000000e-03 : f32
    %130 = arith.mulf %cst_46, %129 : f32
    %c0_i32 = arith.constant 0 : i32
    %131 = arith.cmpi eq, %arg0, %c0_i32 : i32
    %132 = arith.extui %131 : i1 to i32
    %c0_i32_47 = arith.constant 0 : i32
    %133 = arith.cmpi ne, %132, %c0_i32_47 : i32
    scf.if %133 {
      %c0_52 = arith.constant 0 : index
      %c0_53 = arith.constant 0 : index
      %137 = vector.load %arg15[%c0_52, %c0_53] : memref<18x64xf32, #tpu.memory_space<vmem>>, vector<18x64xf32>
      %c0_54 = arith.constant 0 : index
      %c0_55 = arith.constant 0 : index
      %138 = vector.load %arg16[%c0_54, %c0_55] : memref<18x64xf32, #tpu.memory_space<vmem>>, vector<18x64xf32>
      %139 = vector.extract_strided_slice %137 {offsets = [1, 0], sizes = [17, 64], strides = [1, 1]} : vector<18x64xf32> to vector<17x64xf32>
      %140 = vector.extract_strided_slice %137 {offsets = [0, 0], sizes = [17, 64], strides = [1, 1]} : vector<18x64xf32> to vector<17x64xf32>
      %141 = arith.subf %139, %140 : vector<17x64xf32>
      %142 = vector.extract_strided_slice %138 {offsets = [1, 0], sizes = [17, 64], strides = [1, 1]} : vector<18x64xf32> to vector<17x64xf32>
      %143 = vector.extract_strided_slice %138 {offsets = [0, 0], sizes = [17, 64], strides = [1, 1]} : vector<18x64xf32> to vector<17x64xf32>
      %144 = arith.subf %142, %143 : vector<17x64xf32>
      %145 = arith.mulf %141, %141 : vector<17x64xf32>
      %146 = arith.mulf %144, %144 : vector<17x64xf32>
      %147 = arith.addf %145, %146 : vector<17x64xf32>
      %cst_56 = arith.constant 9.99999971E-10 : f32
      %148 = vector.broadcast %cst_56 : f32 to vector<17x64xf32>
      %149 = arith.addf %147, %148 : vector<17x64xf32>
      %150 = math.sqrt %149 : vector<17x64xf32>
      %151 = arith.mulf %149, %150 : vector<17x64xf32>
      %152 = vector.shape_cast %151 : vector<17x64xf32> to vector<1x17x64xf32>
      %cst_57 = arith.constant dense<0.000000e+00> : vector<1xf32>
      %153 = vector.multi_reduction <add>, %152, %cst_57 [1, 2] : vector<1x17x64xf32> to vector<1xf32>
      %154 = vector.shape_cast %153 : vector<1xf32> to vector<1x1x1xf32>
      %155 = vector.extract %154[0, 0, 0] : f32 from vector<1x1x1xf32>
      %cst_58 = arith.constant 1.700000e+01 : f32
      %156 = arith.divf %155, %cst_58 : f32
      %c0_59 = arith.constant 0 : index
      %c0_60 = arith.constant 0 : index
      %157 = vector.load %arg17[%c0_59, %c0_60] : memref<18x64xf32, #tpu.memory_space<vmem>>, vector<18x64xf32>
      %c0_61 = arith.constant 0 : index
      %c0_62 = arith.constant 0 : index
      %158 = vector.load %arg18[%c0_61, %c0_62] : memref<18x64xf32, #tpu.memory_space<vmem>>, vector<18x64xf32>
      %159 = vector.extract_strided_slice %157 {offsets = [1, 0], sizes = [17, 64], strides = [1, 1]} : vector<18x64xf32> to vector<17x64xf32>
      %160 = vector.extract_strided_slice %157 {offsets = [0, 0], sizes = [17, 64], strides = [1, 1]} : vector<18x64xf32> to vector<17x64xf32>
      %161 = arith.subf %159, %160 : vector<17x64xf32>
      %162 = vector.extract_strided_slice %158 {offsets = [1, 0], sizes = [17, 64], strides = [1, 1]} : vector<18x64xf32> to vector<17x64xf32>
      %163 = vector.extract_strided_slice %158 {offsets = [0, 0], sizes = [17, 64], strides = [1, 1]} : vector<18x64xf32> to vector<17x64xf32>
      %164 = arith.subf %162, %163 : vector<17x64xf32>
      %165 = arith.mulf %161, %161 : vector<17x64xf32>
      %166 = arith.mulf %164, %164 : vector<17x64xf32>
      %167 = arith.addf %165, %166 : vector<17x64xf32>
      %cst_63 = arith.constant 9.99999971E-10 : f32
      %168 = vector.broadcast %cst_63 : f32 to vector<17x64xf32>
      %169 = arith.addf %167, %168 : vector<17x64xf32>
      %170 = math.sqrt %169 : vector<17x64xf32>
      %171 = arith.mulf %169, %170 : vector<17x64xf32>
      %172 = vector.shape_cast %171 : vector<17x64xf32> to vector<1x17x64xf32>
      %cst_64 = arith.constant dense<0.000000e+00> : vector<1xf32>
      %173 = vector.multi_reduction <add>, %172, %cst_64 [1, 2] : vector<1x17x64xf32> to vector<1xf32>
      %174 = vector.shape_cast %173 : vector<1xf32> to vector<1x1x1xf32>
      %175 = vector.extract %174[0, 0, 0] : f32 from vector<1x1x1xf32>
      %cst_65 = arith.constant 1.700000e+01 : f32
      %176 = arith.divf %175, %cst_65 : f32
      %177 = arith.addf %156, %176 : f32
      %cst_66 = arith.constant 1.000000e+00 : f32
      %178 = arith.mulf %cst_66, %177 : f32
      %c0_67 = arith.constant 0 : index
      %c0_68 = arith.constant 0 : index
      %179 = memref.load %arg22[%c0_67, %c0_68] : memref<1x1xf32, #tpu.memory_space<smem>>
      memref.store %178, %arg22[%c0_67, %c0_68] : memref<1x1xf32, #tpu.memory_space<smem>>
    } else {
    }
    %c0_48 = arith.constant 0 : index
    %c0_49 = arith.constant 0 : index
    %134 = memref.load %arg22[%c0_48, %c0_49] : memref<1x1xf32, #tpu.memory_space<smem>>
    %135 = arith.addf %134, %130 : f32
    %c0_50 = arith.constant 0 : index
    %c0_51 = arith.constant 0 : index
    %136 = memref.load %arg22[%c0_50, %c0_51] : memref<1x1xf32, #tpu.memory_space<smem>>
    memref.store %135, %arg22[%c0_50, %c0_51] : memref<1x1xf32, #tpu.memory_space<smem>>
    return
  }
  func.func @transform_0(%arg0: i32) -> (i32, i32) {
    %c0_i32 = arith.constant 0 : i32
    %c0_i32_0 = arith.constant 0 : i32
    return %arg0, %c0_i32 : i32, i32
  }
  func.func @transform_1(%arg0: i32) -> (i32, i32) {
    %c0_i32 = arith.constant 0 : i32
    %c0_i32_0 = arith.constant 0 : i32
    return %arg0, %c0_i32 : i32, i32
  }
  func.func @transform_2(%arg0: i32) -> (i32, i32) {
    %c0_i32 = arith.constant 0 : i32
    %c0_i32_0 = arith.constant 0 : i32
    return %arg0, %c0_i32 : i32, i32
  }
  func.func @transform_3(%arg0: i32) -> (i32, i32) {
    %c0_i32 = arith.constant 0 : i32
    %c0_i32_0 = arith.constant 0 : i32
    return %arg0, %c0_i32 : i32, i32
  }
  func.func @transform_4(%arg0: i32) -> (i32, i32) {
    %c0_i32 = arith.constant 0 : i32
    %c0_i32_0 = arith.constant 0 : i32
    return %arg0, %c0_i32 : i32, i32
  }
  func.func @transform_5(%arg0: i32) -> (i32, i32) {
    %c0_i32 = arith.constant 0 : i32
    %c0_i32_0 = arith.constant 0 : i32
    return %arg0, %c0_i32 : i32, i32
  }
  func.func @transform_6(%arg0: i32) -> (i32, i32) {
    %c0_i32 = arith.constant 0 : i32
    %c0_i32_0 = arith.constant 0 : i32
    return %arg0, %c0_i32 : i32, i32
  }
  func.func @transform_7(%arg0: i32) -> (i32, i32) {
    %c0_i32 = arith.constant 0 : i32
    %c0_i32_0 = arith.constant 0 : i32
    return %arg0, %c0_i32 : i32, i32
  }
  func.func @transform_8(%arg0: i32) -> (i32, i32) {
    %c0_i32 = arith.constant 0 : i32
    %c0_i32_0 = arith.constant 0 : i32
    return %arg0, %c0_i32 : i32, i32
  }
  func.func @transform_9(%arg0: i32) -> (i32, i32) {
    %c0_i32 = arith.constant 0 : i32
    %c0_i32_0 = arith.constant 0 : i32
    return %arg0, %c0_i32 : i32, i32
  }
  func.func @transform_10(%arg0: i32) -> (i32, i32) {
    %c0_i32 = arith.constant 0 : i32
    %c0_i32_0 = arith.constant 0 : i32
    return %arg0, %c0_i32 : i32, i32
  }
  func.func @transform_11(%arg0: i32) -> (i32, i32) {
    %c0_i32 = arith.constant 0 : i32
    %c0_i32_0 = arith.constant 0 : i32
    return %arg0, %c0_i32 : i32, i32
  }
  func.func @transform_12(%arg0: i32) -> (i32, i32) {
    %c0_i32 = arith.constant 0 : i32
    %c0_i32_0 = arith.constant 0 : i32
    return %arg0, %c0_i32 : i32, i32
  }
  func.func @transform_13(%arg0: i32) -> (i32, i32) {
    %c0_i32 = arith.constant 0 : i32
    %c0_i32_0 = arith.constant 0 : i32
    return %arg0, %c0_i32 : i32, i32
  }
  func.func @transform_14(%arg0: i32) -> (i32, i32) {
    %c0_i32 = arith.constant 0 : i32
    %c0_i32_0 = arith.constant 0 : i32
    %c0_i32_1 = arith.constant 0 : i32
    return %c0_i32, %c0_i32_0 : i32, i32
  }
  func.func @transform_15(%arg0: i32) -> (i32, i32) {
    %c0_i32 = arith.constant 0 : i32
    %c0_i32_0 = arith.constant 0 : i32
    %c0_i32_1 = arith.constant 0 : i32
    return %c0_i32, %c0_i32_0 : i32, i32
  }
  func.func @transform_16(%arg0: i32) -> (i32, i32) {
    %c0_i32 = arith.constant 0 : i32
    %c0_i32_0 = arith.constant 0 : i32
    %c0_i32_1 = arith.constant 0 : i32
    return %c0_i32, %c0_i32_0 : i32, i32
  }
  func.func @transform_17(%arg0: i32) -> (i32, i32) {
    %c0_i32 = arith.constant 0 : i32
    %c0_i32_0 = arith.constant 0 : i32
    %c0_i32_1 = arith.constant 0 : i32
    return %c0_i32, %c0_i32_0 : i32, i32
  }
  func.func @transform_18(%arg0: i32) -> (i32, i32) {
    %c0_i32 = arith.constant 0 : i32
    %c0_i32_0 = arith.constant 0 : i32
    return %arg0, %c0_i32 : i32, i32
  }
  func.func @transform_19(%arg0: i32) -> (i32, i32) {
    %c0_i32 = arith.constant 0 : i32
    %c0_i32_0 = arith.constant 0 : i32
    return %arg0, %c0_i32 : i32, i32
  }
  func.func @transform_20(%arg0: i32) -> (i32, i32) {
    %c0_i32 = arith.constant 0 : i32
    %c0_i32_0 = arith.constant 0 : i32
    return %arg0, %c0_i32 : i32, i32
  }
  func.func @transform_21(%arg0: i32) -> (i32, i32) {
    %c0_i32 = arith.constant 0 : i32
    %c0_i32_0 = arith.constant 0 : i32
    %c0_i32_1 = arith.constant 0 : i32
    return %c0_i32, %c0_i32_0 : i32, i32
  }
}

</mosaic_0001>

<llo_original>
// kernel: tpu_custom_call.1
$region0: #{tpu_custom_call.1}
  #allocation0 [shape = 'u32[]', space=smem, size = 0x4, offset = 0x4, fixed_abs, tag = 'smem constant byte address 0x4 - core index']
  #allocation1 [shape = 'u32[72,128]{1,0:T(1,128)}', space=vmem, size = 0x9000, scoped, tag = 'internal scratch']
  %s0 = inlined_call_operand.hbm [shape: f32[8,64], index: 0, kind: input, shape index: {}]
  %s1 = inlined_call_operand.hbm [shape: f32[8,64], index: 1, kind: input, shape index: {}]
  %s2 = inlined_call_operand.hbm [shape: f32[8,64], index: 2, kind: input, shape index: {}]
  %s3 = inlined_call_operand.hbm [shape: f32[8,64], index: 3, kind: input, shape index: {}]
  %s4 = inlined_call_operand.hbm [shape: f32[8,64], index: 4, kind: input, shape index: {}]
  %s5 = inlined_call_operand.hbm [shape: f32[8,64], index: 5, kind: input, shape index: {}]
  %s6 = inlined_call_operand.hbm [shape: f32[8,64], index: 6, kind: input, shape index: {}]
  %s7 = inlined_call_operand.hbm [shape: f32[8,64], index: 7, kind: input, shape index: {}]
  %s8 = inlined_call_operand.hbm [shape: f32[8,64], index: 8, kind: input, shape index: {}]
  %s9 = inlined_call_operand.vmem [shape: f32[8,64], index: 9, kind: input, shape index: {}]
  %s10 = inlined_call_operand.hbm [shape: f32[8,64], index: 10, kind: input, shape index: {}]
  %s11 = inlined_call_operand.hbm [shape: f32[8,64], index: 11, kind: input, shape index: {}]
  %s12 = inlined_call_operand.hbm [shape: f32[8,64], index: 12, kind: input, shape index: {}]
  %s13 = inlined_call_operand.hbm [shape: f32[8,64], index: 13, kind: input, shape index: {}]
  %s14 = inlined_call_operand.hbm [shape: f32[18,64], index: 14, kind: input, shape index: {}]
  %s15 = inlined_call_operand.hbm [shape: f32[18,64], index: 15, kind: input, shape index: {}]
  %s16 = inlined_call_operand.hbm [shape: f32[18,64], index: 16, kind: input, shape index: {}]
  %s17 = inlined_call_operand.hbm [shape: f32[18,64], index: 17, kind: input, shape index: {}]
  %s18 = inlined_call_operand.hbm [shape: f32[8,64], index: 18, kind: output, shape index: {0}]
  %s19 = inlined_call_operand.hbm [shape: f32[8,64], index: 19, kind: output, shape index: {1}]
  %s20 = inlined_call_operand.vmem [shape: f32[8,1], index: 20, kind: output, shape index: {2}]
  %s21 = inlined_call_operand.hbm [shape: f32[1,1], index: 21, kind: output, shape index: {3}]
  %22 = xla_tuple %s18, %s19, %s20, %s21
  %s23 = sld [smem:[#allocation0]]
  $region178: #{tpu_custom_call.1} parent=0
    _
  %s25 = ssub.s32 1, %s23
  %s26 = scalar_select 0, %s25, %s23
  $region1: #{tpu_custom_call.1} parent=0
    #allocation2 [shape = 'u8[4096]{0}', space=vmem, size = 0x1000, scoped, tag = 'input window, operand 0, single buffered']
    #allocation3 [shape = 's32[1]{0}', space=sflag, size = 0x4, scoped, tag = 'scoped memory for tpu_custom_call.1']
    #allocation4 [shape = 's32[1]{0}', space=sflag, size = 0x4, scoped, tag = 'scoped memory for tpu_custom_call.1']
    #allocation5 [shape = 's32[1]{0}', space=sflag, size = 0x4, scoped, tag = 'scoped memory for tpu_custom_call.1']
    #allocation6 [shape = 'u8[4096]{0}', space=vmem, size = 0x1000, scoped, tag = 'input window, operand 1, single buffered']
    #allocation7 [shape = 's32[1]{0}', space=sflag, size = 0x4, scoped, tag = 'scoped memory for tpu_custom_call.1']
    #allocation8 [shape = 'u8[4096]{0}', space=vmem, size = 0x1000, scoped, tag = 'input window, operand 2, single buffered']
    #allocation9 [shape = 'u8[4096]{0}', space=vmem, size = 0x1000, scoped, tag = 'input window, operand 3, single buffered']
    #allocation10 [shape = 's32[1]{0}', space=sflag, size = 0x4, scoped, tag = 'scoped memory for tpu_custom_call.1']
    #allocation11 [shape = 'u8[4096]{0}', space=vmem, size = 0x1000, scoped, tag = 'input window, operand 4, single buffered']
    #allocation12 [shape = 'u8[4096]{0}', space=vmem, size = 0x1000, scoped, tag = 'input window, operand 5, single buffered']
    #allocation13 [shape = 's32[1]{0}', space=sflag, size = 0x4, scoped, tag = 'scoped memory for tpu_custom_call.1']
    #allocation14 [shape = 'u8[4096]{0}', space=vmem, size = 0x1000, scoped, tag = 'input window, operand 6, single buffered']
    #allocation15 [shape = 'u8[4096]{0}', space=vmem, size = 0x1000, scoped, tag = 'input window, operand 7, single buffered']
    #allocation16 [shape = 's32[1]{0}', space=sflag, size = 0x4, scoped, tag = 'scoped memory for tpu_custom_call.1']
    #allocation17 [shape = 'u8[4096]{0}', space=vmem, size = 0x1000, scoped, tag = 'input window, operand 8, single buffered']
    #allocation18 [shape = 'u8[4096]{0}', space=vmem, size = 0x1000, scoped, tag = 'input window, operand 10, single buffered']
    #allocation19 [shape = 's32[1]{0}', space=sflag, size = 0x4, scoped, tag = 'scoped memory for tpu_custom_call.1']
    #allocation20 [shape = 'u8[4096]{0}', space=vmem, size = 0x1000, scoped, tag = 'input window, operand 11, single buffered']
    #allocation21 [shape = 'u8[4096]{0}', space=vmem, size = 0x1000, scoped, tag = 'input window, operand 12, single buffered']
    #allocation22 [shape = 's32[1]{0}', space=sflag, size = 0x4, scoped, tag = 'scoped memory for tpu_custom_call.1']
    #allocation23 [shape = 'u8[4096]{0}', space=vmem, size = 0x1000, scoped, tag = 'input window, operand 13, single buffered']
    #allocation24 [shape = 'u8[12288]{0}', space=vmem, size = 0x3000, scoped, tag = 'input window, operand 14, single buffered']
    #allocation25 [shape = 's32[1]{0}', space=sflag, size = 0x4, scoped, tag = 'scoped memory for tpu_custom_call.1']
    #allocation26 [shape = 'u8[12288]{0}', space=vmem, size = 0x3000, scoped, tag = 'input window, operand 15, single buffered']
    #allocation27 [shape = 'u8[12288]{0}', space=vmem, size = 0x3000, scoped, tag = 'input window, operand 16, single buffered']
    #allocation28 [shape = 's32[1]{0}', space=sflag, size = 0x4, scoped, tag = 'scoped memory for tpu_custom_call.1']
    #allocation29 [shape = 'u8[12288]{0}', space=vmem, size = 0x3000, scoped, tag = 'input window, operand 17, single buffered']
    #allocation30 [shape = 'u8[4096]{0}', space=vmem, size = 0x1000, scoped, tag = 'output window, operand 0, single buffered']
    #allocation31 [shape = 'u8[4096]{0}', space=vmem, size = 0x1000, scoped, tag = 'output window, operand 1, single buffered']
    #allocation32 [shape = 's32[1]{0}', space=sflag, size = 0x4, scoped, tag = 'scoped memory for tpu_custom_call.1']
    #allocation33 [shape = 'u8[512]{0}', space=smem, size = 0x200, scoped, tag = 'output window, operand 3, single buffered']
    %27 = vsyncpa [#allocation3], 0
    %28 = vsyncpa [#allocation7], 0
    %29 = vsyncpa [#allocation10], 0
    %30 = vsyncpa [#allocation13], 0
    %31 = vsyncpa [#allocation16], 0
    %32 = vsyncpa [#allocation19], 0
    %33 = vsyncpa [#allocation22], 0
    %34 = vsyncpa [#allocation25], 0
    %35 = vsyncpa [#allocation28], 0
    %36 = vsyncpa [#allocation4], 0
    %37 = vsyncpa [#allocation32], 0
    %38 = vsyncpa [#allocation5], 0
    // Predicated region
    $region2: #{tpu_custom_call.1} parent=1 // pred_check
      _
    $region3: #{tpu_custom_call.1} parent=1 // pred_check_branch
      %40 = sbr.rel (0) target = $region5
    $region4: #{tpu_custom_call.1} parent=1 // pred_region
      %42 = vsyncadd [#allocation3], 0
      %s44 = sshll.u32 %s0, 4
      %s45 = int_to_ptr.hbm [resolvable:$true] %s44
      %s46 = sshll.u32 [#allocation2], 4
      %s47 = int_to_ptr.vmem [resolvable:$true] %s46
      %49 = dma.hbm_to_vmem [thread:$0]  %s45, 128, %s47, [#allocation3]
    $region5: #{tpu_custom_call.1} parent=1 // pred_fallthru
      _
    // Predicated region
    $region6: #{tpu_custom_call.1} parent=1 // pred_check
      _
    $region7: #{tpu_custom_call.1} parent=1 // pred_check_branch
      %51 = sbr.rel (0) target = $region9
    $region8: #{tpu_custom_call.1} parent=1 // pred_region
      %53 = vsyncadd [#allocation7], 0
      %s55 = sshll.u32 %s1, 4
      %s56 = int_to_ptr.hbm [resolvable:$true] %s55
      %s57 = sshll.u32 [#allocation6], 4
      %s58 = int_to_ptr.vmem [resolvable:$true] %s57
      %60 = dma.hbm_to_vmem [thread:$0]  %s56, 128, %s58, [#allocation7]
    $region9: #{tpu_custom_call.1} parent=1 // pred_fallthru
      _
    // Predicated region
    $region10: #{tpu_custom_call.1} parent=1 // pred_check
      _
    $region11: #{tpu_custom_call.1} parent=1 // pred_check_branch
      %62 = sbr.rel (0) target = $region13
    $region12: #{tpu_custom_call.1} parent=1 // pred_region
      %64 = vsyncadd [#allocation7], 0
      %s66 = sshll.u32 %s2, 4
      %s67 = int_to_ptr.hbm [resolvable:$true] %s66
      %s68 = sshll.u32 [#allocation8], 4
      %s69 = int_to_ptr.vmem [resolvable:$true] %s68
      %71 = dma.hbm_to_vmem [thread:$0]  %s67, 128, %s69, [#allocation7]
    $region13: #{tpu_custom_call.1} parent=1 // pred_fallthru
      _
    // Predicated region
    $region14: #{tpu_custom_call.1} parent=1 // pred_check
      _
    $region15: #{tpu_custom_call.1} parent=1 // pred_check_branch
      %73 = sbr.rel (0) target = $region17
    $region16: #{tpu_custom_call.1} parent=1 // pred_region
      %75 = vsyncadd [#allocation10], 0
      %s77 = sshll.u32 %s3, 4
      %s78 = int_to_ptr.hbm [resolvable:$true] %s77
      %s79 = sshll.u32 [#allocation9], 4
      %s80 = int_to_ptr.vmem [resolvable:$true] %s79
      %82 = dma.hbm_to_vmem [thread:$0]  %s78, 128, %s80, [#allocation10]
    $region17: #{tpu_custom_call.1} parent=1 // pred_fallthru
      _
    // Predicated region
    $region18: #{tpu_custom_call.1} parent=1 // pred_check
      _
    $region19: #{tpu_custom_call.1} parent=1 // pred_check_branch
      %84 = sbr.rel (0) target = $region21
    $region20: #{tpu_custom_call.1} parent=1 // pred_region
      %86 = vsyncadd [#allocation10], 0
      %s88 = sshll.u32 %s4, 4
      %s89 = int_to_ptr.hbm [resolvable:$true] %s88
      %s90 = sshll.u32 [#allocation11], 4
      %s91 = int_to_ptr.vmem [resolvable:$true] %s90
      %93 = dma.hbm_to_vmem [thread:$0]  %s89, 128, %s91, [#allocation10]
    $region21: #{tpu_custom_call.1} parent=1 // pred_fallthru
      _
    // Predicated region
    $region22: #{tpu_custom_call.1} parent=1 // pred_check
      _
    $region23: #{tpu_custom_call.1} parent=1 // pred_check_branch
      %95 = sbr.rel (0) target = $region25
    $region24: #{tpu_custom_call.1} parent=1 // pred_region
      %97 = vsyncadd [#allocation13], 0
      %s99 = sshll.u32 %s5, 4
      %s100 = int_to_ptr.hbm [resolvable:$true] %s99
      %s101 = sshll.u32 [#allocation12], 4
      %s102 = int_to_ptr.vmem [resolvable:$true] %s101
      %104 = dma.hbm_to_vmem [thread:$0]  %s100, 128, %s102, [#allocation13]
    $region25: #{tpu_custom_call.1} parent=1 // pred_fallthru
      _
    // Predicated region
    $region26: #{tpu_custom_call.1} parent=1 // pred_check
      _
    $region27: #{tpu_custom_call.1} parent=1 // pred_check_branch
      %106 = sbr.rel (0) target = $region29
    $region28: #{tpu_custom_call.1} parent=1 // pred_region
      %108 = vsyncadd [#allocation13], 0
      %s110 = sshll.u32 %s6, 4
      %s111 = int_to_ptr.hbm [resolvable:$true] %s110
      %s112 = sshll.u32 [#allocation14], 4
      %s113 = int_to_ptr.vmem [resolvable:$true] %s112
      %115 = dma.hbm_to_vmem [thread:$0]  %s111, 128, %s113, [#allocation13]
    $region29: #{tpu_custom_call.1} parent=1 // pred_fallthru
      _
    // Predicated region
    $region30: #{tpu_custom_call.1} parent=1 // pred_check
      _
    $region31: #{tpu_custom_call.1} parent=1 // pred_check_branch
      %117 = sbr.rel (0) target = $region33
    $region32: #{tpu_custom_call.1} parent=1 // pred_region
      %119 = vsyncadd [#allocation16], 0
      %s121 = sshll.u32 %s7, 4
      %s122 = int_to_ptr.hbm [resolvable:$true] %s121
      %s123 = sshll.u32 [#allocation15], 4
      %s124 = int_to_ptr.vmem [resolvable:$true] %s123
      %126 = dma.hbm_to_vmem [thread:$0]  %s122, 128, %s124, [#allocation16]
    $region33: #{tpu_custom_call.1} parent=1 // pred_fallthru
      _
    // Predicated region
    $region34: #{tpu_custom_call.1} parent=1 // pred_check
      _
    $region35: #{tpu_custom_call.1} parent=1 // pred_check_branch
      %128 = sbr.rel (0) target = $region37
    $region36: #{tpu_custom_call.1} parent=1 // pred_region
      %130 = vsyncadd [#allocation16], 0
      %s132 = sshll.u32 %s8, 4
      %s133 = int_to_ptr.hbm [resolvable:$true] %s132
      %s134 = sshll.u32 [#allocation17], 4
      %s135 = int_to_ptr.vmem [resolvable:$true] %s134
      %137 = dma.hbm_to_vmem [thread:$0]  %s133, 128, %s135, [#allocation16]
    $region37: #{tpu_custom_call.1} parent=1 // pred_fallthru
      _
    // Predicated region
    $region38: #{tpu_custom_call.1} parent=1 // pred_check
      _
    $region39: #{tpu_custom_call.1} parent=1 // pred_check_branch
      %139 = sbr.rel (0) target = $region41
    $region40: #{tpu_custom_call.1} parent=1 // pred_region
      _
    $region41: #{tpu_custom_call.1} parent=1 // pred_fallthru
      _
    // Predicated region
    $region42: #{tpu_custom_call.1} parent=1 // pred_check
      _
    $region43: #{tpu_custom_call.1} parent=1 // pred_check_branch
      %141 = sbr.rel (0) target = $region45
    $region44: #{tpu_custom_call.1} parent=1 // pred_region
      %143 = vsyncadd [#allocation19], 0
      %s145 = sshll.u32 %s10, 4
      %s146 = int_to_ptr.hbm [resolvable:$true] %s145
      %s147 = sshll.u32 [#allocation18], 4
      %s148 = int_to_ptr.vmem [resolvable:$true] %s147
      %150 = dma.hbm_to_vmem [thread:$0]  %s146, 128, %s148, [#allocation19]
    $region45: #{tpu_custom_call.1} parent=1 // pred_fallthru
      _
    // Predicated region
    $region46: #{tpu_custom_call.1} parent=1 // pred_check
      _
    $region47: #{tpu_custom_call.1} parent=1 // pred_check_branch
      %152 = sbr.rel (0) target = $region49
    $region48: #{tpu_custom_call.1} parent=1 // pred_region
      %154 = vsyncadd [#allocation19], 0
      %s156 = sshll.u32 %s11, 4
      %s157 = int_to_ptr.hbm [resolvable:$true] %s156
      %s158 = sshll.u32 [#allocation20], 4
      %s159 = int_to_ptr.vmem [resolvable:$true] %s158
      %161 = dma.hbm_to_vmem [thread:$0]  %s157, 128, %s159, [#allocation19]
    $region49: #{tpu_custom_call.1} parent=1 // pred_fallthru
      _
    // Predicated region
    $region50: #{tpu_custom_call.1} parent=1 // pred_check
      _
    $region51: #{tpu_custom_call.1} parent=1 // pred_check_branch
      %163 = sbr.rel (0) target = $region53
    $region52: #{tpu_custom_call.1} parent=1 // pred_region
      %165 = vsyncadd [#allocation22], 0
      %s167 = sshll.u32 %s12, 4
      %s168 = int_to_ptr.hbm [resolvable:$true] %s167
      %s169 = sshll.u32 [#allocation21], 4
      %s170 = int_to_ptr.vmem [resolvable:$true] %s169
      %172 = dma.hbm_to_vmem [thread:$0]  %s168, 128, %s170, [#allocation22]
    $region53: #{tpu_custom_call.1} parent=1 // pred_fallthru
      _
    // Predicated region
    $region54: #{tpu_custom_call.1} parent=1 // pred_check
      _
    $region55: #{tpu_custom_call.1} parent=1 // pred_check_branch
      %174 = sbr.rel (0) target = $region57
    $region56: #{tpu_custom_call.1} parent=1 // pred_region
      %176 = vsyncadd [#allocation22], 0
      %s178 = sshll.u32 %s13, 4
      %s179 = int_to_ptr.hbm [resolvable:$true] %s178
      %s180 = sshll.u32 [#allocation23], 4
      %s181 = int_to_ptr.vmem [resolvable:$true] %s180
      %183 = dma.hbm_to_vmem [thread:$0]  %s179, 128, %s181, [#allocation22]
    $region57: #{tpu_custom_call.1} parent=1 // pred_fallthru
      _
    // Predicated region
    $region58: #{tpu_custom_call.1} parent=1 // pred_check
      _
    $region59: #{tpu_custom_call.1} parent=1 // pred_check_branch
      %185 = sbr.rel (0) target = $region61
    $region60: #{tpu_custom_call.1} parent=1 // pred_region
      %187 = vsyncadd [#allocation25], 0
      %s188 = sshll.u32 %s14, 4
      %s189 = int_to_ptr.hbm [resolvable:$true] %s188
      %s190 = sshll.u32 [#allocation24], 4
      %s191 = int_to_ptr.vmem [resolvable:$true] %s190
      %196 = dma.hbm_to_vmem [thread:$0]  %s189, 384, %s191, [#allocation25], 128, 128, 8
    $region61: #{tpu_custom_call.1} parent=1 // pred_fallthru
      _
    // Predicated region
    $region62: #{tpu_custom_call.1} parent=1 // pred_check
      _
    $region63: #{tpu_custom_call.1} parent=1 // pred_check_branch
      %198 = sbr.rel (0) target = $region65
    $region64: #{tpu_custom_call.1} parent=1 // pred_region
      %200 = vsyncadd [#allocation25], 0
      %s201 = sshll.u32 %s15, 4
      %s202 = int_to_ptr.hbm [resolvable:$true] %s201
      %s203 = sshll.u32 [#allocation26], 4
      %s204 = int_to_ptr.vmem [resolvable:$true] %s203
      %209 = dma.hbm_to_vmem [thread:$0]  %s202, 384, %s204, [#allocation25], 128, 128, 8
    $region65: #{tpu_custom_call.1} parent=1 // pred_fallthru
      _
    // Predicated region
    $region66: #{tpu_custom_call.1} parent=1 // pred_check
      _
    $region67: #{tpu_custom_call.1} parent=1 // pred_check_branch
      %211 = sbr.rel (0) target = $region69
    $region68: #{tpu_custom_call.1} parent=1 // pred_region
      %213 = vsyncadd [#allocation28], 0
      %s214 = sshll.u32 %s16, 4
      %s215 = int_to_ptr.hbm [resolvable:$true] %s214
      %s216 = sshll.u32 [#allocation27], 4
      %s217 = int_to_ptr.vmem [resolvable:$true] %s216
      %222 = dma.hbm_to_vmem [thread:$0]  %s215, 384, %s217, [#allocation28], 128, 128, 8
    $region69: #{tpu_custom_call.1} parent=1 // pred_fallthru
      _
    // Predicated region
    $region70: #{tpu_custom_call.1} parent=1 // pred_check
      _
    $region71: #{tpu_custom_call.1} parent=1 // pred_check_branch
      %224 = sbr.rel (0) target = $region73
    $region72: #{tpu_custom_call.1} parent=1 // pred_region
      %226 = vsyncadd [#allocation28], 0
      %s227 = sshll.u32 %s17, 4
      %s228 = int_to_ptr.hbm [resolvable:$true] %s227
      %s229 = sshll.u32 [#allocation29], 4
      %s230 = int_to_ptr.vmem [resolvable:$true] %s229
      %235 = dma.hbm_to_vmem [thread:$0]  %s228, 384, %s230, [#allocation28], 128, 128, 8
    $region73: #{tpu_custom_call.1} parent=1 // pred_fallthru
      _
    // Predicated region
    $region74: #{tpu_custom_call.1} parent=1 // pred_check
      _
    $region75: #{tpu_custom_call.1} parent=1 // pred_check_branch
      %237 = sbr.rel (0) target = $region77
    $region76: #{tpu_custom_call.1} parent=1 // pred_region
      %239 = dma.done [#allocation3], 128
    $region77: #{tpu_custom_call.1} parent=1 // pred_fallthru
      _
    // Predicated region
    $region78: #{tpu_custom_call.1} parent=1 // pred_check
      _
    $region79: #{tpu_custom_call.1} parent=1 // pred_check_branch
      %241 = sbr.rel (0) target = $region81
    $region80: #{tpu_custom_call.1} parent=1 // pred_region
      %243 = dma.done [#allocation7], 128
    $region81: #{tpu_custom_call.1} parent=1 // pred_fallthru
      _
    // Predicated region
    $region82: #{tpu_custom_call.1} parent=1 // pred_check
      _
    $region83: #{tpu_custom_call.1} parent=1 // pred_check_branch
      %245 = sbr.rel (0) target = $region85
    $region84: #{tpu_custom_call.1} parent=1 // pred_region
      %247 = dma.done [#allocation7], 128
    $region85: #{tpu_custom_call.1} parent=1 // pred_fallthru
      _
    // Predicated region
    $region86: #{tpu_custom_call.1} parent=1 // pred_check
      _
    $region87: #{tpu_custom_call.1} parent=1 // pred_check_branch
      %249 = sbr.rel (0) target = $region89
    $region88: #{tpu_custom_call.1} parent=1 // pred_region
      %251 = dma.done [#allocation10], 128
    $region89: #{tpu_custom_call.1} parent=1 // pred_fallthru
      _
    // Predicated region
    $region90: #{tpu_custom_call.1} parent=1 // pred_check
      _
    $region91: #{tpu_custom_call.1} parent=1 // pred_check_branch
      %253 = sbr.rel (0) target = $region93
    $region92: #{tpu_custom_call.1} parent=1 // pred_region
      %255 = dma.done [#allocation10], 128
    $region93: #{tpu_custom_call.1} parent=1 // pred_fallthru
      _
    // Predicated region
    $region94: #{tpu_custom_call.1} parent=1 // pred_check
      _
    $region95: #{tpu_custom_call.1} parent=1 // pred_check_branch
      %257 = sbr.rel (0) target = $region97
    $region96: #{tpu_custom_call.1} parent=1 // pred_region
      %259 = dma.done [#allocation13], 128
    $region97: #{tpu_custom_call.1} parent=1 // pred_fallthru
      _
    // Predicated region
    $region98: #{tpu_custom_call.1} parent=1 // pred_check
      _
    $region99: #{tpu_custom_call.1} parent=1 // pred_check_branch
      %261 = sbr.rel (0) target = $region101
    $region100: #{tpu_custom_call.1} parent=1 // pred_region
      %263 = dma.done [#allocation13], 128
    $region101: #{tpu_custom_call.1} parent=1 // pred_fallthru
      _
    // Predicated region
    $region102: #{tpu_custom_call.1} parent=1 // pred_check
      _
    $region103: #{tpu_custom_call.1} parent=1 // pred_check_branch
      %265 = sbr.rel (0) target = $region105
    $region104: #{tpu_custom_call.1} parent=1 // pred_region
      %267 = dma.done [#allocation16], 128
    $region105: #{tpu_custom_call.1} parent=1 // pred_fallthru
      _
    // Predicated region
    $region106: #{tpu_custom_call.1} parent=1 // pred_check
      _
    $region107: #{tpu_custom_call.1} parent=1 // pred_check_branch
      %269 = sbr.rel (0) target = $region109
    $region108: #{tpu_custom_call.1} parent=1 // pred_region
      %271 = dma.done [#allocation16], 128
    $region109: #{tpu_custom_call.1} parent=1 // pred_fallthru
      _
    // Predicated region
    $region110: #{tpu_custom_call.1} parent=1 // pred_check
      _
    $region111: #{tpu_custom_call.1} parent=1 // pred_check_branch
      %273 = sbr.rel (0) target = $region113
    $region112: #{tpu_custom_call.1} parent=1 // pred_region
      %275 = dma.done [#allocation19], 128
    $region113: #{tpu_custom_call.1} parent=1 // pred_fallthru
      _
    // Predicated region
    $region114: #{tpu_custom_call.1} parent=1 // pred_check
      _
    $region115: #{tpu_custom_call.1} parent=1 // pred_check_branch
      %277 = sbr.rel (0) target = $region117
    $region116: #{tpu_custom_call.1} parent=1 // pred_region
      %279 = dma.done [#allocation19], 128
    $region117: #{tpu_custom_call.1} parent=1 // pred_fallthru
      _
    // Predicated region
    $region118: #{tpu_custom_call.1} parent=1 // pred_check
      _
    $region119: #{tpu_custom_call.1} parent=1 // pred_check_branch
      %281 = sbr.rel (0) target = $region121
    $region120: #{tpu_custom_call.1} parent=1 // pred_region
      %283 = dma.done [#allocation22], 128
    $region121: #{tpu_custom_call.1} parent=1 // pred_fallthru
      _
    // Predicated region
    $region122: #{tpu_custom_call.1} parent=1 // pred_check
      _
    $region123: #{tpu_custom_call.1} parent=1 // pred_check_branch
      %285 = sbr.rel (0) target = $region125
    $region124: #{tpu_custom_call.1} parent=1 // pred_region
      %287 = dma.done [#allocation22], 128
    $region125: #{tpu_custom_call.1} parent=1 // pred_fallthru
      _
    // Predicated region
    $region126: #{tpu_custom_call.1} parent=1 // pred_check
      _
    $region127: #{tpu_custom_call.1} parent=1 // pred_check_branch
      %289 = sbr.rel (0) target = $region129
    $region128: #{tpu_custom_call.1} parent=1 // pred_region
      %291 = dma.done [#allocation25], 384
    $region129: #{tpu_custom_call.1} parent=1 // pred_fallthru
      _
    // Predicated region
    $region130: #{tpu_custom_call.1} parent=1 // pred_check
      _
    $region131: #{tpu_custom_call.1} parent=1 // pred_check_branch
      %293 = sbr.rel (0) target = $region133
    $region132: #{tpu_custom_call.1} parent=1 // pred_region
      %295 = dma.done [#allocation25], 384
    $region133: #{tpu_custom_call.1} parent=1 // pred_fallthru
      _
    // Predicated region
    $region134: #{tpu_custom_call.1} parent=1 // pred_check
      _
    $region135: #{tpu_custom_call.1} parent=1 // pred_check_branch
      %297 = sbr.rel (0) target = $region137
    $region136: #{tpu_custom_call.1} parent=1 // pred_region
      %299 = dma.done [#allocation28], 384
    $region137: #{tpu_custom_call.1} parent=1 // pred_fallthru
      _
    // Predicated region
    $region138: #{tpu_custom_call.1} parent=1 // pred_check
      _
    $region139: #{tpu_custom_call.1} parent=1 // pred_check_branch
      %301 = sbr.rel (0) target = $region141
    $region140: #{tpu_custom_call.1} parent=1 // pred_region
      %303 = dma.done [#allocation28], 384
    $region141: #{tpu_custom_call.1} parent=1 // pred_fallthru
      _
    %v304 = vld [vmem:[#allocation2] sm:$0xff]
    %v305 = vld [vmem:[#allocation6] sm:$0xff]
    %v306 = vld [vmem:[#allocation8] sm:$0xff]
    %v307 = vld [vmem:[#allocation9] sm:$0xff]
    %v308 = vld [vmem:[#allocation11] sm:$0xff]
    %v309 = vld [vmem:[#allocation12] sm:$0xff]
    %v310 = vld [vmem:[#allocation14] sm:$0xff]
    %v311 = vld [vmem:[#allocation15] sm:$0xff]
    %v312 = vld [vmem:[#allocation17] sm:$0xff]
    %v313 = vld [vmem:[%s9] sm:$0xff]
    %v314 = vld [vmem:[#allocation18] sm:$0xff]
    %v315 = vld [vmem:[#allocation20] sm:$0xff]
    %v316 = vld [vmem:[#allocation21] sm:$0xff]
    %v317 = vld [vmem:[#allocation23] sm:$0xff]
    %v318 = vmul.f32 %v305, %v308
    %v319 = vmul.f32 %v304, %v309
    %v320 = vadd.f32 %v318, %v319
    %v321 = vmul.f32 %v304, %v308
    %v322 = vmul.f32 %v305, %v309
    %v323 = vsub.f32 %v321, %v322
    %v324 = vmul.f32 %v315, %v312
    %v325 = vmul.f32 %v314, %v313
    %v326 = vadd.f32 %v324, %v325
    %v327 = vmul.f32 %v314, %v312
    %v328 = vmul.f32 %v315, %v313
    %v329 = vsub.f32 %v327, %v328
    %v330 = vmul.f32 %v305, %v314
    %v331 = vmul.f32 %v304, %v315
    %v332 = vadd.f32 %v330, %v331
    %v333 = vmul.f32 %v304, %v314
    %v334 = vmul.f32 %v305, %v315
    %v335 = vsub.f32 %v333, %v334
    %v336 = vmul.f32 %v326, 5.0
    %v337 = vadd.f32 %v320, %v336
    %v338 = vmul.f32 %v332, 5.0
    %v339 = vadd.f32 %v337, %v338
    %v340 = vmul.f32 %v329, 5.0
    %v341 = vadd.f32 %v323, %v340
    %v342 = vmul.f32 %v335, 5.0
    %v343 = vadd.f32 %v341, %v342
    %v344 = vmul.f32 %v315, %v310
    %v345 = vmul.f32 %v314, %v311
    %v346 = vsub.f32 %v344, %v345
    %v347 = vmul.f32 %v315, %v311
    %v348 = vmul.f32 %v314, %v310
    %v349 = vadd.f32 %v347, %v348
    %v350 = vmul.f32 %v346, %v305
    %v351 = vmul.f32 %v349, %v304
    %v352 = vadd.f32 %v350, %v351
    %vm353 = vcmask 523264
    %v354 = vsel %vm353, %v352, 0.0
    %355 = vadd.xlane.f32.xlu0 %v354
    %v356 = vpop.xlane.xlu0 %355
    %v357 = vmul.f32 %v356, 5.0
    %358 = vst.msk [vmem:[#allocation30] sm:$0xff] %vm353, %v339
    %359 = vst.msk [vmem:[#allocation31] sm:$0xff] %vm353, %v343
    %vm360 = vcmask 7168
    %361 = vst.msk [vmem:[%s20] sm:$0xff] %vm360, %v357
    %v362 = vmul.f32 %v304, %v304
    %v363 = vmul.f32 %v305, %v305
    %v364 = vadd.f32 %v362, %v363
    %v365 = vrsqrt.pop %v364
    %v366 = vmul.f32 %v365, %v364
    %v367 = vmul.f32 %v366, %v365
    %v368 = vmul.f32 0.5, %v367
    %v369 = vsub.f32 1.5, %v368
    %v370 = vmul.f32 %v365, %v369
    %v371 = vmul.f32 %v364, %v370
    %vm372 = vcmp.eq.f32.partialorder %v364, inf
    %v373 = vsel %vm372, %v364, %v371
    %vm374 = vcmp.eq.f32.partialorder %v364, 0.0
    %v375 = vand.u32 %v364, 2147483648
    %v376 = vsel %vm374, %v375, %v373
    %v377 = vmul.f32 %v364, %v376
    %v378 = vsel %vm353, %v377, 0.0
    %379 = vadd.xlane.f32.xlu0 %v378
    %v380 = vpop.xlane.xlu0 %379
    %v381 = vrot.slane %v380, 4
    %v382 = vadd.f32 %v380, %v381
    %v383 = vrot.slane %v382, 2
    %v384 = vadd.f32 %v382, %v383
    %v385 = vrot.slane %v384, 1
    %v386 = vadd.f32 %v384, %v385
    %s387 = vtos %v386
    %v388 = vmul.f32 %v306, %v306
    %v389 = vmul.f32 %v307, %v307
    %v390 = vadd.f32 %v388, %v389
    %v391 = vrsqrt.pop %v390
    %v392 = vmul.f32 %v391, %v390
    %v393 = vmul.f32 %v392, %v391
    %v394 = vmul.f32 0.5, %v393
    %v395 = vsub.f32 1.5, %v394
    %v396 = vmul.f32 %v391, %v395
    %v397 = vmul.f32 %v390, %v396
    %vm398 = vcmp.eq.f32.partialorder %v390, inf
    %v399 = vsel %vm398, %v390, %v397
    %vm400 = vcmp.eq.f32.partialorder %v390, 0.0
    %v401 = vand.u32 %v390, 2147483648
    %v402 = vsel %vm400, %v401, %v399
    %v403 = vmul.f32 %v390, %v402
    %v404 = vsel %vm353, %v403, 0.0
    %405 = vadd.xlane.f32.xlu0 %v404
    %v406 = vpop.xlane.xlu0 %405
    %v407 = vrot.slane %v406, 4
    %v408 = vadd.f32 %v406, %v407
    %v409 = vrot.slane %v408, 2
    %v410 = vadd.f32 %v408, %v409
    %v411 = vrot.slane %v410, 1
    %v412 = vadd.f32 %v410, %v411
    %s413 = vtos %v412
    %s414 = sadd.f32 %s387, %s413
    %v415 = vmul.f32 %v308, %v308
    %v416 = vmul.f32 %v309, %v309
    %v417 = vadd.f32 %v415, %v416
    %v418 = vrsqrt.pop %v417
    %v419 = vmul.f32 %v418, %v417
    %v420 = vmul.f32 %v419, %v418
    %v421 = vmul.f32 0.5, %v420
    %v422 = vsub.f32 1.5, %v421
    %v423 = vmul.f32 %v418, %v422
    %v424 = vmul.f32 %v417, %v423
    %vm425 = vcmp.eq.f32.partialorder %v417, inf
    %v426 = vsel %vm425, %v417, %v424
    %vm427 = vcmp.eq.f32.partialorder %v417, 0.0
    %v428 = vand.u32 %v417, 2147483648
    %v429 = vsel %vm427, %v428, %v426
    %v430 = vmul.f32 %v417, %v429
    %v431 = vsel %vm353, %v430, 0.0
    %432 = vadd.xlane.f32.xlu0 %v431
    %v433 = vpop.xlane.xlu0 %432
    %v434 = vrot.slane %v433, 4
    %v435 = vadd.f32 %v433, %v434
    %v436 = vrot.slane %v435, 2
    %v437 = vadd.f32 %v435, %v436
    %v438 = vrot.slane %v437, 1
    %v439 = vadd.f32 %v437, %v438
    %s440 = vtos %v439
    %s441 = sadd.f32 %s414, %s440
    %v442 = vmul.f32 %v310, %v310
    %v443 = vmul.f32 %v311, %v311
    %v444 = vadd.f32 %v442, %v443
    %v445 = vrsqrt.pop %v444
    %v446 = vmul.f32 %v445, %v444
    %v447 = vmul.f32 %v446, %v445
    %v448 = vmul.f32 0.5, %v447
    %v449 = vsub.f32 1.5, %v448
    %v450 = vmul.f32 %v445, %v449
    %v451 = vmul.f32 %v444, %v450
    %vm452 = vcmp.eq.f32.partialorder %v444, inf
    %v453 = vsel %vm452, %v444, %v451
    %vm454 = vcmp.eq.f32.partialorder %v444, 0.0
    %v455 = vand.u32 %v444, 2147483648
    %v456 = vsel %vm454, %v455, %v453
    %v457 = vmul.f32 %v444, %v456
    %v458 = vsel %vm353, %v457, 0.0
    %459 = vadd.xlane.f32.xlu0 %v458
    %v460 = vpop.xlane.xlu0 %459
    %v461 = vrot.slane %v460, 4
    %v462 = vadd.f32 %v460, %v461
    %v463 = vrot.slane %v462, 2
    %v464 = vadd.f32 %v462, %v463
    %v465 = vrot.slane %v464, 1
    %v466 = vadd.f32 %v464, %v465
    %s467 = vtos %v466
    %s468 = sadd.f32 %s441, %s467
    %v469 = vmul.f32 %v312, %v312
    %v470 = vmul.f32 %v313, %v313
    %v471 = vadd.f32 %v469, %v470
    %v472 = vrsqrt.pop %v471
    %v473 = vmul.f32 %v472, %v471
    %v474 = vmul.f32 %v473, %v472
    %v475 = vmul.f32 0.5, %v474
    %v476 = vsub.f32 1.5, %v475
    %v477 = vmul.f32 %v472, %v476
    %v478 = vmul.f32 %v471, %v477
    %vm479 = vcmp.eq.f32.partialorder %v471, inf
    %v480 = vsel %vm479, %v471, %v478
    %vm481 = vcmp.eq.f32.partialorder %v471, 0.0
    %v482 = vand.u32 %v471, 2147483648
    %v483 = vsel %vm481, %v482, %v480
    %v484 = vmul.f32 %v471, %v483
    %v485 = vsel %vm353, %v484, 0.0
    %486 = vadd.xlane.f32.xlu0 %v485
    %v487 = vpop.xlane.xlu0 %486
    %v488 = vrot.slane %v487, 4
    %v489 = vadd.f32 %v487, %v488
    %v490 = vrot.slane %v489, 2
    %v491 = vadd.f32 %v489, %v490
    %v492 = vrot.slane %v491, 1
    %v493 = vadd.f32 %v491, %v492
    %s494 = vtos %v493
    %s495 = sadd.f32 %s468, %s494
    %v496 = vmul.f32 %v314, %v314
    %v497 = vmul.f32 %v315, %v315
    %v498 = vadd.f32 %v496, %v497
    %v499 = vrsqrt.pop %v498
    %v500 = vmul.f32 %v499, %v498
    %v501 = vmul.f32 %v500, %v499
    %v502 = vmul.f32 0.5, %v501
    %v503 = vsub.f32 1.5, %v502
    %v504 = vmul.f32 %v499, %v503
    %v505 = vmul.f32 %v498, %v504
    %vm506 = vcmp.eq.f32.partialorder %v498, inf
    %v507 = vsel %vm506, %v498, %v505
    %vm508 = vcmp.eq.f32.partialorder %v498, 0.0
    %v509 = vand.u32 %v498, 2147483648
    %v510 = vsel %vm508, %v509, %v507
    %v511 = vmul.f32 %v498, %v510
    %v512 = vsel %vm353, %v511, 0.0
    %513 = vadd.xlane.f32.xlu0 %v512
    %v514 = vpop.xlane.xlu0 %513
    %v515 = vrot.slane %v514, 4
    %v516 = vadd.f32 %v514, %v515
    %v517 = vrot.slane %v516, 2
    %v518 = vadd.f32 %v516, %v517
    %v519 = vrot.slane %v518, 1
    %v520 = vadd.f32 %v518, %v519
    %s521 = vtos %v520
    %s522 = sadd.f32 %s495, %s521
    %v523 = vmul.f32 %v316, %v316
    %v524 = vmul.f32 %v317, %v317
    %v525 = vadd.f32 %v523, %v524
    %v526 = vrsqrt.pop %v525
    %v527 = vmul.f32 %v526, %v525
    %v528 = vmul.f32 %v527, %v526
    %v529 = vmul.f32 0.5, %v528
    %v530 = vsub.f32 1.5, %v529
    %v531 = vmul.f32 %v526, %v530
    %v532 = vmul.f32 %v525, %v531
    %vm533 = vcmp.eq.f32.partialorder %v525, inf
    %v534 = vsel %vm533, %v525, %v532
    %vm535 = vcmp.eq.f32.partialorder %v525, 0.0
    %v536 = vand.u32 %v525, 2147483648
    %v537 = vsel %vm535, %v536, %v534
    %v538 = vmul.f32 %v525, %v537
    %v539 = vsel %vm353, %v538, 0.0
    %540 = vadd.xlane.f32.xlu0 %v539
    %v541 = vpop.xlane.xlu0 %540
    %v542 = vrot.slane %v541, 4
    %v543 = vadd.f32 %v541, %v542
    %v544 = vrot.slane %v543, 2
    %v545 = vadd.f32 %v543, %v544
    %v546 = vrot.slane %v545, 1
    %v547 = vadd.f32 %v545, %v546
    %s548 = vtos %v547
    %s549 = sadd.f32 %s522, %s548
    %v550 = vrcp.pop 8.0
    %v551 = vmul.f32 8.0, %v550
    %v552 = vsub.f32 1.0, %v551
    %v553 = vmul.f32 %v550, %v552
    %v554 = vadd.f32 %v550, %v553
    %vm555 = vweird.f32 %v550
    %v556 = vsel %vm555, %v550, %v554
    %s557 = vtos %v556
    %s558 = smul.f32 %s549, %s557
    %s559 = smul.f32 %s558, 0.005
    %p560 = scmp.eq.s32.totalorder 0, 0
    // Predicated region
    $region142: #{tpu_custom_call.1} parent=1 // pred_check
      %p561 = pneg %p560
    $region143: #{tpu_custom_call.1} parent=1 // pred_check_branch
      %563 = sbr.rel (%p561) target = $region145
    $region144: #{tpu_custom_call.1} parent=1 // pred_region
      %v564 = vld [vmem:[#allocation24] sm:$0xff]
      %v565 = vld [vmem:[#allocation24 + $0x8] sm:$0xff]
      %v566 = vld [vmem:[#allocation24 + $0x10] sm:$0x3]
      %v567 = vld [vmem:[#allocation26] sm:$0xff]
      %v568 = vld [vmem:[#allocation26 + $0x8] sm:$0xff]
      %v569 = vld [vmem:[#allocation26 + $0x10] sm:$0x3]
      %vm573 = vcmask 1040384
      %v574 = vrot.slane %v564, 7
      %v575 = vrot.slane %v565, 7
      %v576 = vsel %vm573, %v574, %v575
      %v577 = vrot.slane %v566, 7
      %v578 = vsel %vm573, %v575, %v577
      %v582 = vsub.f32 %v564, %v574
      %v583 = vsub.f32 %v565, %v576
      %v584 = vsub.f32 %v566, %v578
      %v588 = vrot.slane %v567, 7
      %v589 = vrot.slane %v568, 7
      %v590 = vsel %vm573, %v588, %v589
      %v591 = vrot.slane %v569, 7
      %v592 = vsel %vm573, %v589, %v591
      %v596 = vsub.f32 %v567, %v588
      %v597 = vsub.f32 %v568, %v590
      %v598 = vsub.f32 %v569, %v592
      %v599 = vmul.f32 %v582, %v582
      %v600 = vmul.f32 %v583, %v583
      %v601 = vmul.f32 %v584, %v584
      %v602 = vmul.f32 %v596, %v596
      %v603 = vmul.f32 %v597, %v597
      %v604 = vmul.f32 %v598, %v598
      %v605 = vadd.f32 %v599, %v602
      %v606 = vadd.f32 %v600, %v603
      %v607 = vadd.f32 %v601, %v604
      %v608 = vadd.f32 %v605, 1e-09
      %v609 = vadd.f32 %v606, 1e-09
      %v610 = vadd.f32 %v607, 1e-09
      %v611 = vrsqrt.pop %v608
      %v612 = vmul.f32 %v611, %v608
      %v613 = vmul.f32 %v612, %v611
      %v614 = vmul.f32 0.5, %v613
      %v615 = vsub.f32 1.5, %v614
      %v616 = vmul.f32 %v611, %v615
      %v617 = vmul.f32 %v608, %v616
      %vm618 = vcmp.eq.f32.partialorder %v608, inf
      %v619 = vsel %vm618, %v608, %v617
      %vm620 = vcmp.eq.f32.partialorder %v608, 0.0
      %v621 = vand.u32 %v608, 2147483648
      %v622 = vsel %vm620, %v621, %v619
      %v623 = vrsqrt.pop %v609
      %v624 = vmul.f32 %v623, %v609
      %v625 = vmul.f32 %v624, %v623
      %v626 = vmul.f32 0.5, %v625
      %v627 = vsub.f32 1.5, %v626
      %v628 = vmul.f32 %v623, %v627
      %v629 = vmul.f32 %v609, %v628
      %vm630 = vcmp.eq.f32.partialorder %v609, inf
      %v631 = vsel %vm630, %v609, %v629
      %vm632 = vcmp.eq.f32.partialorder %v609, 0.0
      %v633 = vand.u32 %v609, 2147483648
      %v634 = vsel %vm632, %v633, %v631
      %v635 = vrsqrt.pop %v610
      %v636 = vmul.f32 %v635, %v610
      %v637 = vmul.f32 %v636, %v635
      %v638 = vmul.f32 0.5, %v637
      %v639 = vsub.f32 1.5, %v638
      %v640 = vmul.f32 %v635, %v639
      %v641 = vmul.f32 %v610, %v640
      %vm642 = vcmp.eq.f32.partialorder %v610, inf
      %v643 = vsel %vm642, %v610, %v641
      %vm644 = vcmp.eq.f32.partialorder %v610, 0.0
      %v645 = vand.u32 %v610, 2147483648
      %v646 = vsel %vm644, %v645, %v643
      %v647 = vmul.f32 %v608, %v622
      %v648 = vmul.f32 %v609, %v634
      %v649 = vmul.f32 %v610, %v646
      %vm653 = vcmask 1046528
      %v654 = vrot.slane %v647, 1
      %v655 = vrot.slane %v648, 1
      %v656 = vsel %vm653, %v654, %v655
      %v657 = vrot.slane %v649, 1
      %v658 = vsel %vm653, %v655, %v657
      %v662 = vsel %vm353, %v656, 0.0
      %v663 = vsel %vm353, %v658, 0.0
      %v664 = vadd.f32 %v662, %v663
      %vm665 = vcmask 516096
      %v666 = vsel %vm665, %v657, 0.0
      %v667 = vadd.f32 %v664, %v666
      %668 = vadd.xlane.f32.xlu0 %v667
      %v669 = vpop.xlane.xlu0 %668
      %v670 = vrot.slane %v669, 4
      %v671 = vadd.f32 %v669, %v670
      %v672 = vrot.slane %v671, 2
      %v673 = vadd.f32 %v671, %v672
      %v674 = vrot.slane %v673, 1
      %v675 = vadd.f32 %v673, %v674
      %s676 = vtos %v675
      %v677 = vrcp.pop 17.0
      %v678 = vmul.f32 17.0, %v677
      %v679 = vsub.f32 1.0, %v678
      %v680 = vmul.f32 %v677, %v679
      %v681 = vadd.f32 %v677, %v680
      %vm682 = vweird.f32 %v677
      %v683 = vsel %vm682, %v677, %v681
      %s684 = vtos %v683
      %s685 = smul.f32 %s676, %s684
      %v686 = vld [vmem:[#allocation27] sm:$0xff]
      %v687 = vld [vmem:[#allocation27 + $0x8] sm:$0xff]
      %v688 = vld [vmem:[#allocation27 + $0x10] sm:$0x3]
      %v689 = vld [vmem:[#allocation29] sm:$0xff]
      %v690 = vld [vmem:[#allocation29 + $0x8] sm:$0xff]
      %v691 = vld [vmem:[#allocation29 + $0x10] sm:$0x3]
      %v695 = vrot.slane %v686, 7
      %v696 = vrot.slane %v687, 7
      %v697 = vsel %vm573, %v695, %v696
      %v698 = vrot.slane %v688, 7
      %v699 = vsel %vm573, %v696, %v698
      %v703 = vsub.f32 %v686, %v695
      %v704 = vsub.f32 %v687, %v697
      %v705 = vsub.f32 %v688, %v699
      %v709 = vrot.slane %v689, 7
      %v710 = vrot.slane %v690, 7
      %v711 = vsel %vm573, %v709, %v710
      %v712 = vrot.slane %v691, 7
      %v713 = vsel %vm573, %v710, %v712
      %v717 = vsub.f32 %v689, %v709
      %v718 = vsub.f32 %v690, %v711
      %v719 = vsub.f32 %v691, %v713
      %v720 = vmul.f32 %v703, %v703
      %v721 = vmul.f32 %v704, %v704
      %v722 = vmul.f32 %v705, %v705
      %v723 = vmul.f32 %v717, %v717
      %v724 = vmul.f32 %v718, %v718
      %v725 = vmul.f32 %v719, %v719
      %v726 = vadd.f32 %v720, %v723
      %v727 = vadd.f32 %v721, %v724
      %v728 = vadd.f32 %v722, %v725
      %v729 = vadd.f32 %v726, 1e-09
      %v730 = vadd.f32 %v727, 1e-09
      %v731 = vadd.f32 %v728, 1e-09
      %v732 = vrsqrt.pop %v729
      %v733 = vmul.f32 %v732, %v729
      %v734 = vmul.f32 %v733, %v732
      %v735 = vmul.f32 0.5, %v734
      %v736 = vsub.f32 1.5, %v735
      %v737 = vmul.f32 %v732, %v736
      %v738 = vmul.f32 %v729, %v737
      %vm739 = vcmp.eq.f32.partialorder %v729, inf
      %v740 = vsel %vm739, %v729, %v738
      %vm741 = vcmp.eq.f32.partialorder %v729, 0.0
      %v742 = vand.u32 %v729, 2147483648
      %v743 = vsel %vm741, %v742, %v740
      %v744 = vrsqrt.pop %v730
      %v745 = vmul.f32 %v744, %v730
      %v746 = vmul.f32 %v745, %v744
      %v747 = vmul.f32 0.5, %v746
      %v748 = vsub.f32 1.5, %v747
      %v749 = vmul.f32 %v744, %v748
      %v750 = vmul.f32 %v730, %v749
      %vm751 = vcmp.eq.f32.partialorder %v730, inf
      %v752 = vsel %vm751, %v730, %v750
      %vm753 = vcmp.eq.f32.partialorder %v730, 0.0
      %v754 = vand.u32 %v730, 2147483648
      %v755 = vsel %vm753, %v754, %v752
      %v756 = vrsqrt.pop %v731
      %v757 = vmul.f32 %v756, %v731
      %v758 = vmul.f32 %v757, %v756
      %v759 = vmul.f32 0.5, %v758
      %v760 = vsub.f32 1.5, %v759
      %v761 = vmul.f32 %v756, %v760
      %v762 = vmul.f32 %v731, %v761
      %vm763 = vcmp.eq.f32.partialorder %v731, inf
      %v764 = vsel %vm763, %v731, %v762
      %vm765 = vcmp.eq.f32.partialorder %v731, 0.0
      %v766 = vand.u32 %v731, 2147483648
      %v767 = vsel %vm765, %v766, %v764
      %v768 = vmul.f32 %v729, %v743
      %v769 = vmul.f32 %v730, %v755
      %v770 = vmul.f32 %v731, %v767
      %v774 = vrot.slane %v768, 1
      %v775 = vrot.slane %v769, 1
      %v776 = vsel %vm653, %v774, %v775
      %v777 = vrot.slane %v770, 1
      %v778 = vsel %vm653, %v775, %v777
      %v782 = vsel %vm353, %v776, 0.0
      %v783 = vsel %vm353, %v778, 0.0
      %v784 = vadd.f32 %v782, %v783
      %v785 = vsel %vm665, %v777, 0.0
      %v786 = vadd.f32 %v784, %v785
      %787 = vadd.xlane.f32.xlu0 %v786
      %v788 = vpop.xlane.xlu0 %787
      %v789 = vrot.slane %v788, 4
      %v790 = vadd.f32 %v788, %v789
      %v791 = vrot.slane %v790, 2
      %v792 = vadd.f32 %v790, %v791
      %v793 = vrot.slane %v792, 1
      %v794 = vadd.f32 %v792, %v793
      %s795 = vtos %v794
      %v796 = vrcp.pop 17.0
      %v797 = vmul.f32 17.0, %v796
      %v798 = vsub.f32 1.0, %v797
      %v799 = vmul.f32 %v796, %v798
      %v800 = vadd.f32 %v796, %v799
      %vm801 = vweird.f32 %v796
      %v802 = vsel %vm801, %v796, %v800
      %s803 = vtos %v802
      %s804 = smul.f32 %s795, %s803
      %s805 = sadd.f32 %s685, %s804
      %s806 = scalar_lea.smem [#allocation33], 0
      %807 = sst [smem:[%s806]] %s805
    $region145: #{tpu_custom_call.1} parent=1 // pred_fallthru
      _
    %s808 = sld [smem:[#allocation33]]
    %s809 = sadd.f32 %s808, %s559
    %s810 = scalar_lea.smem [#allocation33], 0
    %811 = sst [smem:[%s810]] %s809
    // Predicated region
    $region146: #{tpu_custom_call.1} parent=1 // pred_check
      _
    $region147: #{tpu_custom_call.1} parent=1 // pred_check_branch
      %813 = sbr.rel (0) target = $region149
    $region148: #{tpu_custom_call.1} parent=1 // pred_region
      %815 = vsyncadd [#allocation4], 0
      %s817 = sshll.u32 [#allocation30], 4
      %s818 = int_to_ptr.vmem [resolvable:$true] %s817
      %s819 = sshll.u32 %s18, 4
      %s820 = int_to_ptr.hbm [resolvable:$true] %s819
      %822 = dma.vmem_to_hbm [thread:$0]  %s818, 128, %s820, [#allocation4]
    $region149: #{tpu_custom_call.1} parent=1 // pred_fallthru
      _
    // Predicated region
    $region150: #{tpu_custom_call.1} parent=1 // pred_check
      _
    $region151: #{tpu_custom_call.1} parent=1 // pred_check_branch
      %824 = sbr.rel (0) target = $region153
    $region152: #{tpu_custom_call.1} parent=1 // pred_region
      %826 = vsyncadd [#allocation32], 0
      %s828 = sshll.u32 [#allocation31], 4
      %s829 = int_to_ptr.vmem [resolvable:$true] %s828
      %s830 = sshll.u32 %s19, 4
      %s831 = int_to_ptr.hbm [resolvable:$true] %s830
      %833 = dma.vmem_to_hbm [thread:$0]  %s829, 128, %s831, [#allocation32]
    $region153: #{tpu_custom_call.1} parent=1 // pred_fallthru
      _
    // Predicated region
    $region154: #{tpu_custom_call.1} parent=1 // pred_check
      _
    $region155: #{tpu_custom_call.1} parent=1 // pred_check_branch
      %835 = sbr.rel (0) target = $region157
    $region156: #{tpu_custom_call.1} parent=1 // pred_region
      _
    $region157: #{tpu_custom_call.1} parent=1 // pred_fallthru
      _
    // Predicated region
    $region158: #{tpu_custom_call.1} parent=1 // pred_check
      _
    $region159: #{tpu_custom_call.1} parent=1 // pred_check_branch
      %837 = sbr.rel (0) target = $region161
    $region160: #{tpu_custom_call.1} parent=1 // pred_region
      %839 = vsyncadd [#allocation5], 0
      %s841 = sshll.u32 %s21, 4
      %s842 = int_to_ptr.hbm [resolvable:$true] %s841
      %844 = dma.smem_to_hbm [#allocation33], 16, %s842, [#allocation5]
    $region161: #{tpu_custom_call.1} parent=1 // pred_fallthru
      _
    // Predicated region
    $region162: #{tpu_custom_call.1} parent=1 // pred_check
      _
    $region163: #{tpu_custom_call.1} parent=1 // pred_check_branch
      %846 = sbr.rel (0) target = $region165
    $region164: #{tpu_custom_call.1} parent=1 // pred_region
      %848 = dma.done [#allocation4], 128
    $region165: #{tpu_custom_call.1} parent=1 // pred_fallthru
      _
    // Predicated region
    $region166: #{tpu_custom_call.1} parent=1 // pred_check
      _
    $region167: #{tpu_custom_call.1} parent=1 // pred_check_branch
      %850 = sbr.rel (0) target = $region169
    $region168: #{tpu_custom_call.1} parent=1 // pred_region
      %852 = dma.done [#allocation32], 128
    $region169: #{tpu_custom_call.1} parent=1 // pred_fallthru
      _
    // Predicated region
    $region170: #{tpu_custom_call.1} parent=1 // pred_check
      _
    $region171: #{tpu_custom_call.1} parent=1 // pred_check_branch
      %854 = sbr.rel (0) target = $region173
    $region172: #{tpu_custom_call.1} parent=1 // pred_region
      _
    $region173: #{tpu_custom_call.1} parent=1 // pred_fallthru
      _
    // Predicated region
    $region174: #{tpu_custom_call.1} parent=1 // pred_check
      _
    $region175: #{tpu_custom_call.1} parent=1 // pred_check_branch
      %856 = sbr.rel (0) target = $region177
    $region176: #{tpu_custom_call.1} parent=1 // pred_region
      %858 = dma.done [#allocation5], 16
    $region177: #{tpu_custom_call.1} parent=1 // pred_fallthru
      _
    %859 = sfence
    %860 = vsyncpa [#allocation3], 1
    %861 = vsyncpa [#allocation7], 1
    %862 = vsyncpa [#allocation10], 1
    %863 = vsyncpa [#allocation13], 1
    %864 = vsyncpa [#allocation16], 1
    %865 = vsyncpa [#allocation19], 1
    %866 = vsyncpa [#allocation22], 1
    %867 = vsyncpa [#allocation25], 1
    %868 = vsyncpa [#allocation28], 1
    %869 = vsyncpa [#allocation4], 1
    %870 = vsyncpa [#allocation32], 1
    %871 = vsyncpa [#allocation5], 1

</llo_original>
